<compile_context>
chip_gen: v6e
topology: v6e:2x2x1
jax: 0.10.0
libtpu: 0.0.40
codegen_flags: <defaults>
</compile_context>

<pallas_src>
import functools

import jax
import jax.numpy as jnp
from jax.experimental import pallas as pl
from jax.experimental.pallas import tpu as pltpu

LN_EPS = 1e-5
BN_EPS = 1e-5
LANES = 128          # lane width; every channel-like dim is zero-padded to this


def _block_schedule(c_in, c_out, n_blocks):
    """Per-block (in, out) channels, mirroring the torch ModuleList construction."""
    return ([(c_in, c_in)] * (n_blocks // 2)
            + [(c_in, c_out)]
            + [(c_out, c_out)] * (n_blocks - n_blocks // 2 - 1))


# ----------------------------------------------------------------------------- params


def init_params(key, C_in, C_out, n_blocks, n_speakers):
    """Deterministic synthetic parameters (shapes match the torch module)."""
    blocks = _block_schedule(C_in, C_out, n_blocks)
    n_keys = 8 + 11 * len(blocks) + 8
    keys = iter(jax.random.split(key, n_keys))

    def nrm(shape, scale=0.2):
        return scale * jax.random.normal(next(keys), shape, jnp.float32)

    def pos(shape, lo=0.5, hi=1.5):
        return jax.random.uniform(next(keys), shape, jnp.float32, lo, hi)

    def fold_bn(gamma, beta, mean, var):
        scale = gamma * jax.lax.rsqrt(var + BN_EPS)
        shift = beta - mean * scale
        return scale, shift

    params = {
        "ln_g": pos((1, C_in)),
        "ln_b": nrm((1, C_in), 0.05),
        "w1": nrm((C_in, C_in)),
        "b1": nrm((1, C_in), 0.05),
        "blocks": [],
        "w2": nrm((C_out, C_out)),
        "b2": nrm((1, C_out), 0.05),
        "wl": nrm((C_out, n_speakers)),
        "bl": nrm((1, n_speakers), 0.05),
    }
    for (ci, co) in blocks:
        s1, t1 = fold_bn(pos((1, co)), nrm((1, co), 0.05), nrm((1, co), 0.1), pos((1, co)))
        s2, t2 = fold_bn(pos((1, co)), nrm((1, co), 0.05), nrm((1, co), 0.1), pos((1, co)))
        blk = {
            "w1": nrm((ci, co)),
            "s1": s1, "t1": t1,
            "a1": jnp.full((1, 1), 0.25, jnp.float32),   # PReLU(num_parameters=1)
            "w2": nrm((co, co)),
            "s2": s2, "t2": t2,
            "a2": jnp.full((1, 1), 0.25, jnp.float32),
        }
        if ci != co:
            blk["wds"] = nrm((ci, co))
        params["blocks"].append(blk)
    return params


def _pad_mat(w):
    out = jnp.zeros((LANES, LANES), jnp.float32)
    return out.at[: w.shape[0], : w.shape[1]].set(w.astype(jnp.float32))


def _pad_vec(v):
    v = v.reshape(-1).astype(jnp.float32)
    return jnp.zeros((LANES,), jnp.float32).at[: v.shape[0]].set(v)


def pack_params(params, n_blocks):
    """Fold LN/BN affines into the 1x1-conv weights and pack everything into 3 slabs.

    Returns:
      w_slab : (n_w, 128, 128) bf16 -- all weight matrices, zero padded, lane-dense.
      b_slab : (n_b, 128)      f32  -- all bias / shift vectors, zero padded.
      alphas : (2 * n_blocks,) f32  -- PReLU scalars (go to SMEM / the scalar path).
    """
    C_in = params["w1"].shape[0]
    C_out = params["w2"].shape[0]
    blocks = _block_schedule(C_in, C_out, n_blocks)

    # LayerNorm affine folded into conv1:
    #   (x_hat*g + b) @ W1 + b1 == x_hat @ (diag(g) W1) + (b @ W1 + b1)
    w1_eff = params["ln_g"].reshape(-1, 1) * params["w1"]
    b1_eff = params["ln_b"].reshape(1, -1) @ params["w1"] + params["b1"]

    weights = [w1_eff]
    biases = [b1_eff]
    alphas = []
    for blk, (ci, co) in zip(params["blocks"], blocks):
        # eval-mode BN folded into the conv columns: (y @ W) * s + t == y @ (W * s) + t
        weights.append(blk["w1"] * blk["s1"].reshape(1, -1))
        biases.append(blk["t1"])
        weights.append(blk["w2"] * blk["s2"].reshape(1, -1))
        biases.append(blk["t2"])
        if ci != co:
            weights.append(blk["wds"])
        alphas += [blk["a1"].reshape(()), blk["a2"].reshape(())]

    weights.append(params["w2"])
    biases.append(params["b2"])
    weights.append(params["wl"])
    biases.append(params["bl"])

    w_slab = jnp.stack([_pad_mat(w) for w in weights]).astype(jnp.bfloat16)
    b_slab = jnp.stack([_pad_vec(b) for b in biases])
    alpha_vec = jnp.stack(alphas).astype(jnp.float32)
    return w_slab, b_slab, alpha_vec


# ----------------------------------------------------------------------------- kernel


def _make_kernel(T, C_in, blocks, have_relevant_speakers):
    def _mm(a, w_bf16):
        # MXU: bf16 operands, f32 accumulation.
        return jnp.dot(a.astype(jnp.bfloat16), w_bf16,
                       preferred_element_type=jnp.float32)

    def _prelu(h, alpha):
        return jnp.where(h > 0, h, alpha * h)

    def _maxpool3(h, t_in):
        # MaxPool1d(kernel=3, stride=3), floor mode, over time (sublane axis).
        # The stride-3 row gather + compaction is three static 0/1 selection matmuls on
        # the (otherwise idle) MXU + VPU maxes: no sublane-splitting reshapes, no strided
        # sublane slices. f32 throughout -> pooling is exact.
        t_out = t_in // 3
        row = jax.lax.broadcasted_iota(jnp.int32, (t_out, t_in), 0)
        col = jax.lax.broadcasted_iota(jnp.int32, (t_out, t_in), 1)
        pooled = None
        for k in range(3):
            sel = (col == 3 * row + k).astype(jnp.float32)
            pk = jnp.dot(sel, h, preferred_element_type=jnp.float32)
            pooled = pk if pooled is None else jnp.maximum(pooled, pk)
        return pooled, t_out

    def kernel(x_ref, w_ref, b_ref, alpha_ref, refvec_out, *maybe_logits):
        logits_out = maybe_logits[0] if have_relevant_speakers else None

        x = x_ref[0]                                   # (T, 128) f32, padding lanes = 0
        # LayerNorm over the C_in valid channel lanes (zero padding keeps sums exact).
        lane = jax.lax.broadcasted_iota(jnp.int32, (1, LANES), 1)
        ch_mask = (lane < C_in).astype(jnp.float32)
        inv_c = 1.0 / C_in
        mu = jnp.sum(x, axis=-1, keepdims=True) * inv_c
        d = x - mu
        var = jnp.sum(d * d * ch_mask, axis=-1, keepdims=True) * inv_c
        y = d * jax.lax.rsqrt(var + LN_EPS)
        # Padding lanes of y hold junk (-mu * rsqrt); the zero weight rows below kill it.

        wi, bi = 0, 0
        # conv1 (1x1, bias) with the LayerNorm affine pre-folded into its weight/bias.
        y = _mm(y, w_ref[wi]) + b_ref[pl.ds(bi, 1), :]
        wi += 1
        bi += 1

        t_cur = T
        for k, (ci, co) in enumerate(blocks):
            # conv1x1 + folded BN1 + PReLU
            h = _mm(y, w_ref[wi]) + b_ref[pl.ds(bi, 1), :]
            wi += 1
            bi += 1
            h = _prelu(h, alpha_ref[2 * k])
            # conv1x1 + folded BN2
            h = _mm(h, w_ref[wi]) + b_ref[pl.ds(bi, 1), :]
            wi += 1
            bi += 1
            # skip connection (1x1 downsample conv, no bias, when channels change)
            if ci != co:
                skip = _mm(y, w_ref[wi])
                wi += 1
            else:
                skip = y
            h = _prelu(h + skip, alpha_ref[2 * k + 1])
            y, t_cur = _maxpool3(h, t_cur)

        # conv2 (1x1, bias)
        y = _mm(y, w_ref[wi]) + b_ref[pl.ds(bi, 1), :]
        wi += 1
        bi += 1

        # temporal mean -> speaker reference vector (lane-dense (1, 128) store)
        ref_vec = jnp.mean(y, axis=0, keepdims=True)
        refvec_out[0] = ref_vec

        if have_relevant_speakers:
            logits = _mm(ref_vec, w_ref[wi]) + b_ref[pl.ds(bi, 1), :]
            logits_out[0] = logits

    return kernel


# ----------------------------------------------------------------------------- wrapper


@functools.partial(
    jax.jit,
    static_argnames=("c_out", "n_speakers", "n_blocks", "have_relevant_speakers"))
def speaker_encoder_short(x_btc, w_slab, b_slab, alphas, *, c_out, n_speakers,
                          n_blocks, have_relevant_speakers=True):
    """x_btc: (B, T, C_in) float32 (== torch (B, C_in, T).transpose(1, 2))."""
    B, T, c_in = x_btc.shape
    blocks = _block_schedule(c_in, c_out, n_blocks)
    n_w = w_slab.shape[0]
    n_b = b_slab.shape[0]

    # Lane-dense zero padding of the input channels (sliced back after the kernel).
    x_pad = jnp.zeros((B, T, LANES), jnp.float32).at[:, :, :c_in].set(
        x_btc.astype(jnp.float32))

    kernel = _make_kernel(T, c_in, blocks, have_relevant_speakers)

    vec_shape = jax.ShapeDtypeStruct((B, 1, LANES), jnp.float32)
    out_block = pl.BlockSpec((1, 1, LANES), lambda b: (b, 0, 0))
    if have_relevant_speakers:
        out_shape = (vec_shape, jax.ShapeDtypeStruct((B, 1, LANES), jnp.float32))
        out_specs = (out_block, out_block)
    else:
        out_shape = vec_shape
        out_specs = out_block

    outs = pl.pallas_call(
        kernel,
        out_shape=out_shape,
        grid=(B,),                                    # one program per utterance
        in_specs=[
            pl.BlockSpec((1, T, LANES), lambda b: (b, 0, 0)),        # x, per program
            pl.BlockSpec((n_w, LANES, LANES), lambda b: (0, 0, 0)),  # weight slab, resident
            pl.BlockSpec((n_b, LANES), lambda b: (0, 0)),            # bias slab, resident
            pl.BlockSpec(memory_space=pltpu.MemorySpace.SMEM),       # PReLU scalars
        ],
        out_specs=out_specs,
        compiler_params=pltpu.CompilerParams(
            # v7x: split the batch grid across both TensorCores (harmless on v5e/v6e).
            dimension_semantics=("parallel",)),
        # TODO(synk): at production T, tile the time axis via the BlockSpec (everything
        # except the pools / final mean is position-wise) and set vmem_limit_bytes for
        # v7x's 64 MiB VMEM budget.
    )(x_pad, w_slab, b_slab, alphas)

    if have_relevant_speakers:
        ref_pad, log_pad = outs
        return ref_pad[:, 0, :c_out], log_pad[:, 0, :n_speakers]
    return outs[:, 0, :c_out]


# ----------------------------------------------------------------------------- demo


if __name__ == "__main__":
    B = 2
    C_IN = 16
    C_OUT = 32
    N_RESNETBLOCKS = 3          # -> blocks: (16,16), (16,32), (32,32)
    N_SPEAKERS = 8
    T = 72                      # time: 72 -> 24 -> 8 -> 2 through the 3 max-pools

    key = jax.random.PRNGKey(0)
    x_key, p_key = jax.random.split(key)
    x = jax.random.normal(x_key, (B, T, C_IN), jnp.float32)   # (B, T, C) layout
    params = init_params(p_key, C_IN, C_OUT, N_RESNETBLOCKS, N_SPEAKERS)
    w_slab, b_slab, alphas = pack_params(params, N_RESNETBLOCKS)   # host-side folding/packing

    ref_vec, logits = speaker_encoder_short(
        x, w_slab, b_slab, alphas, c_out=C_OUT, n_speakers=N_SPEAKERS,
        n_blocks=N_RESNETBLOCKS, have_relevant_speakers=True)
    jax.block_until_ready((ref_vec, logits))
    assert ref_vec.shape == (B, C_OUT) and logits.shape == (B, N_SPEAKERS)
    assert bool(jnp.all(jnp.isfinite(ref_vec))) and bool(jnp.all(jnp.isfinite(logits)))

    ref_vec_only = speaker_encoder_short(
        x, w_slab, b_slab, alphas, c_out=C_OUT, n_speakers=N_SPEAKERS,
        n_blocks=N_RESNETBLOCKS, have_relevant_speakers=False)
    jax.block_until_ready(ref_vec_only)
    assert ref_vec_only.shape == (B, C_OUT)
    assert bool(jnp.all(jnp.isfinite(ref_vec_only)))

    print("KERNEL_OK")
</pallas_src>

<mosaic_0001>
module attributes {stable_mosaic.version = 11 : i64} {
  func.func @kernel(%arg0: i32, %arg1: memref<1x72x128xf32, #tpu.memory_space<vmem>>, %arg2: memref<10x128x128xbf16, #tpu.memory_space<vmem>>, %arg3: memref<9x128xf32, #tpu.memory_space<vmem>>, %arg4: memref<6xf32, #tpu.memory_space<smem>>, %arg5: memref<1x1x128xf32, #tpu.memory_space<vmem>>, %arg6: memref<1x1x128xf32, #tpu.memory_space<vmem>>) attributes {dimension_semantics = [#tpu.dimension_semantics<parallel>], iteration_bounds = array<i64: 2>, scalar_prefetch = 0 : i64, scratch_operands = 0 : i64, tpu.core_type = #tpu.core_type<tc>, window_params = [{transform_indices = @transform_0, window_bounds = array<i64: 1, 72, 128>}, {pipeline_mode = #tpu.pipeline_mode<synchronous>, transform_indices = @transform_1, window_bounds = array<i64: 10, 128, 128>}, {pipeline_mode = #tpu.pipeline_mode<synchronous>, transform_indices = @transform_2, window_bounds = array<i64: 9, 128>}, {transform_indices = @transform_3, window_bounds = array<i64: 6>}, {transform_indices = @transform_4, window_bounds = array<i64: 1, 1, 128>}, {transform_indices = @transform_5, window_bounds = array<i64: 1, 1, 128>}]} {
    %c0 = arith.constant 0 : index
    %c0_0 = arith.constant 0 : index
    %c0_1 = arith.constant 0 : index
    %0 = vector.load %arg1[%c0, %c0_0, %c0_1] : memref<1x72x128xf32, #tpu.memory_space<vmem>>, vector<1x72x128xf32>
    %1 = vector.shape_cast %0 : vector<1x72x128xf32> to vector<72x128xf32>
    %2 = tpu.iota {dimensions = array<i32: 1>} : vector<1x128xi32>
    %c16_i32 = arith.constant 16 : i32
    %3 = vector.broadcast %c16_i32 : i32 to vector<1x128xi32>
    %4 = arith.cmpi slt, %2, %3 : vector<1x128xi32>
    %5 = arith.extui %4 : vector<1x128xi1> to vector<1x128xi32>
    %6 = arith.sitofp %5 : vector<1x128xi32> to vector<1x128xf32>
    %cst = arith.constant dense<0.000000e+00> : vector<72xf32>
    %7 = vector.multi_reduction <add>, %1, %cst [1] : vector<72x128xf32> to vector<72xf32>
    %8 = vector.shape_cast %7 : vector<72xf32> to vector<72x1xf32>
    %cst_2 = arith.constant 6.250000e-02 : f32
    %9 = vector.broadcast %cst_2 : f32 to vector<72x1xf32>
    %10 = arith.mulf %8, %9 : vector<72x1xf32>
    %11 = vector.broadcast %10 : vector<72x1xf32> to vector<72x128xf32>
    %12 = arith.subf %1, %11 : vector<72x128xf32>
    %13 = arith.mulf %12, %12 : vector<72x128xf32>
    %14 = vector.broadcast %6 : vector<1x128xf32> to vector<72x128xf32>
    %15 = arith.mulf %13, %14 : vector<72x128xf32>
    %cst_3 = arith.constant dense<0.000000e+00> : vector<72xf32>
    %16 = vector.multi_reduction <add>, %15, %cst_3 [1] : vector<72x128xf32> to vector<72xf32>
    %17 = vector.shape_cast %16 : vector<72xf32> to vector<72x1xf32>
    %cst_4 = arith.constant 6.250000e-02 : f32
    %18 = vector.broadcast %cst_4 : f32 to vector<72x1xf32>
    %19 = arith.mulf %17, %18 : vector<72x1xf32>
    %cst_5 = arith.constant 9.99999974E-6 : f32
    %20 = vector.broadcast %cst_5 : f32 to vector<72x1xf32>
    %21 = arith.addf %19, %20 : vector<72x1xf32>
    %22 = math.rsqrt %21 : vector<72x1xf32>
    %23 = vector.broadcast %22 : vector<72x1xf32> to vector<72x128xf32>
    %24 = arith.mulf %12, %23 : vector<72x128xf32>
    %c0_6 = arith.constant 0 : index
    %c0_7 = arith.constant 0 : index
    %c0_8 = arith.constant 0 : index
    %25 = vector.load %arg2[%c0_6, %c0_7, %c0_8] : memref<10x128x128xbf16, #tpu.memory_space<vmem>>, vector<1x128x128xbf16>
    %26 = vector.shape_cast %25 : vector<1x128x128xbf16> to vector<128x128xbf16>
    %27 = arith.truncf %24 : vector<72x128xf32> to vector<72x128xbf16>
    %cst_9 = arith.constant dense<0.000000e+00> : vector<72x128xf32>
    %28 = tpu.matmul %27, %26, %cst_9 {dimension_numbers = #tpu.dot_dimension_numbers<[1], [0], [0], [1], [0, 0, 1, 1], [], []>} : vector<72x128xbf16>, vector<128x128xbf16>, vector<72x128xf32> -> vector<72x128xf32>
    %c0_10 = arith.constant 0 : index
    %c0_11 = arith.constant 0 : index
    %29 = vector.load %arg3[%c0_10, %c0_11] : memref<9x128xf32, #tpu.memory_space<vmem>>, vector<1x128xf32>
    %30 = vector.broadcast %29 : vector<1x128xf32> to vector<72x128xf32>
    %31 = arith.addf %28, %30 : vector<72x128xf32>
    %c1 = arith.constant 1 : index
    %c0_12 = arith.constant 0 : index
    %c0_13 = arith.constant 0 : index
    %32 = vector.load %arg2[%c1, %c0_12, %c0_13] : memref<10x128x128xbf16, #tpu.memory_space<vmem>>, vector<1x128x128xbf16>
    %33 = vector.shape_cast %32 : vector<1x128x128xbf16> to vector<128x128xbf16>
    %34 = arith.truncf %31 : vector<72x128xf32> to vector<72x128xbf16>
    %cst_14 = arith.constant dense<0.000000e+00> : vector<72x128xf32>
    %35 = tpu.matmul %34, %33, %cst_14 {dimension_numbers = #tpu.dot_dimension_numbers<[1], [0], [0], [1], [0, 0, 1, 1], [], []>} : vector<72x128xbf16>, vector<128x128xbf16>, vector<72x128xf32> -> vector<72x128xf32>
    %c1_15 = arith.constant 1 : index
    %c0_16 = arith.constant 0 : index
    %36 = vector.load %arg3[%c1_15, %c0_16] : memref<9x128xf32, #tpu.memory_space<vmem>>, vector<1x128xf32>
    %37 = vector.broadcast %36 : vector<1x128xf32> to vector<72x128xf32>
    %38 = arith.addf %35, %37 : vector<72x128xf32>
    %c0_17 = arith.constant 0 : index
    %39 = memref.load %arg4[%c0_17] : memref<6xf32, #tpu.memory_space<smem>>
    %cst_18 = arith.constant 0.000000e+00 : f32
    %40 = vector.broadcast %cst_18 : f32 to vector<72x128xf32>
    %41 = arith.cmpf ogt, %38, %40 : vector<72x128xf32>
    %42 = vector.broadcast %39 : f32 to vector<72x128xf32>
    %43 = arith.mulf %42, %38 : vector<72x128xf32>
    %44 = arith.select %41, %38, %43 : vector<72x128xi1>, vector<72x128xf32>
    %c2 = arith.constant 2 : index
    %c0_19 = arith.constant 0 : index
    %c0_20 = arith.constant 0 : index
    %45 = vector.load %arg2[%c2, %c0_19, %c0_20] : memref<10x128x128xbf16, #tpu.memory_space<vmem>>, vector<1x128x128xbf16>
    %46 = vector.shape_cast %45 : vector<1x128x128xbf16> to vector<128x128xbf16>
    %47 = arith.truncf %44 : vector<72x128xf32> to vector<72x128xbf16>
    %cst_21 = arith.constant dense<0.000000e+00> : vector<72x128xf32>
    %48 = tpu.matmul %47, %46, %cst_21 {dimension_numbers = #tpu.dot_dimension_numbers<[1], [0], [0], [1], [0, 0, 1, 1], [], []>} : vector<72x128xbf16>, vector<128x128xbf16>, vector<72x128xf32> -> vector<72x128xf32>
    %c2_22 = arith.constant 2 : index
    %c0_23 = arith.constant 0 : index
    %49 = vector.load %arg3[%c2_22, %c0_23] : memref<9x128xf32, #tpu.memory_space<vmem>>, vector<1x128xf32>
    %50 = vector.broadcast %49 : vector<1x128xf32> to vector<72x128xf32>
    %51 = arith.addf %48, %50 : vector<72x128xf32>
    %52 = arith.addf %51, %31 : vector<72x128xf32>
    %c1_24 = arith.constant 1 : index
    %53 = memref.load %arg4[%c1_24] : memref<6xf32, #tpu.memory_space<smem>>
    %cst_25 = arith.constant 0.000000e+00 : f32
    %54 = vector.broadcast %cst_25 : f32 to vector<72x128xf32>
    %55 = arith.cmpf ogt, %52, %54 : vector<72x128xf32>
    %56 = vector.broadcast %53 : f32 to vector<72x128xf32>
    %57 = arith.mulf %56, %52 : vector<72x128xf32>
    %58 = arith.select %55, %52, %57 : vector<72x128xi1>, vector<72x128xf32>
    %59 = tpu.iota {dimensions = array<i32: 0>} : vector<24x72xi32>
    %60 = tpu.iota {dimensions = array<i32: 1>} : vector<24x72xi32>
    %c3_i32 = arith.constant 3 : i32
    %61 = vector.broadcast %c3_i32 : i32 to vector<24x72xi32>
    %62 = arith.muli %61, %59 : vector<24x72xi32>
    %c0_i32 = arith.constant 0 : i32
    %63 = vector.broadcast %c0_i32 : i32 to vector<24x72xi32>
    %64 = arith.addi %62, %63 : vector<24x72xi32>
    %65 = arith.cmpi eq, %60, %64 : vector<24x72xi32>
    %66 = arith.extui %65 : vector<24x72xi1> to vector<24x72xi32>
    %67 = arith.sitofp %66 : vector<24x72xi32> to vector<24x72xf32>
    %cst_26 = arith.constant dense<0.000000e+00> : vector<24x128xf32>
    %68 = tpu.matmul %67, %58, %cst_26 {dimension_numbers = #tpu.dot_dimension_numbers<[1], [0], [0], [1], [0, 0, 1, 1], [], []>} : vector<24x72xf32>, vector<72x128xf32>, vector<24x128xf32> -> vector<24x128xf32>
    %c3_i32_27 = arith.constant 3 : i32
    %69 = vector.broadcast %c3_i32_27 : i32 to vector<24x72xi32>
    %70 = arith.muli %69, %59 : vector<24x72xi32>
    %c1_i32 = arith.constant 1 : i32
    %71 = vector.broadcast %c1_i32 : i32 to vector<24x72xi32>
    %72 = arith.addi %70, %71 : vector<24x72xi32>
    %73 = arith.cmpi eq, %60, %72 : vector<24x72xi32>
    %74 = arith.extui %73 : vector<24x72xi1> to vector<24x72xi32>
    %75 = arith.sitofp %74 : vector<24x72xi32> to vector<24x72xf32>
    %cst_28 = arith.constant dense<0.000000e+00> : vector<24x128xf32>
    %76 = tpu.matmul %75, %58, %cst_28 {dimension_numbers = #tpu.dot_dimension_numbers<[1], [0], [0], [1], [0, 0, 1, 1], [], []>} : vector<24x72xf32>, vector<72x128xf32>, vector<24x128xf32> -> vector<24x128xf32>
    %77 = arith.maximumf %68, %76 : vector<24x128xf32>
    %c3_i32_29 = arith.constant 3 : i32
    %78 = vector.broadcast %c3_i32_29 : i32 to vector<24x72xi32>
    %79 = arith.muli %78, %59 : vector<24x72xi32>
    %c2_i32 = arith.constant 2 : i32
    %80 = vector.broadcast %c2_i32 : i32 to vector<24x72xi32>
    %81 = arith.addi %79, %80 : vector<24x72xi32>
    %82 = arith.cmpi eq, %60, %81 : vector<24x72xi32>
    %83 = arith.extui %82 : vector<24x72xi1> to vector<24x72xi32>
    %84 = arith.sitofp %83 : vector<24x72xi32> to vector<24x72xf32>
    %cst_30 = arith.constant dense<0.000000e+00> : vector<24x128xf32>
    %85 = tpu.matmul %84, %58, %cst_30 {dimension_numbers = #tpu.dot_dimension_numbers<[1], [0], [0], [1], [0, 0, 1, 1], [], []>} : vector<24x72xf32>, vector<72x128xf32>, vector<24x128xf32> -> vector<24x128xf32>
    %86 = arith.maximumf %77, %85 : vector<24x128xf32>
    %c3 = arith.constant 3 : index
    %c0_31 = arith.constant 0 : index
    %c0_32 = arith.constant 0 : index
    %87 = vector.load %arg2[%c3, %c0_31, %c0_32] : memref<10x128x128xbf16, #tpu.memory_space<vmem>>, vector<1x128x128xbf16>
    %88 = vector.shape_cast %87 : vector<1x128x128xbf16> to vector<128x128xbf16>
    %89 = arith.truncf %86 : vector<24x128xf32> to vector<24x128xbf16>
    %cst_33 = arith.constant dense<0.000000e+00> : vector<24x128xf32>
    %90 = tpu.matmul %89, %88, %cst_33 {dimension_numbers = #tpu.dot_dimension_numbers<[1], [0], [0], [1], [0, 0, 1, 1], [], []>} : vector<24x128xbf16>, vector<128x128xbf16>, vector<24x128xf32> -> vector<24x128xf32>
    %c3_34 = arith.constant 3 : index
    %c0_35 = arith.constant 0 : index
    %91 = vector.load %arg3[%c3_34, %c0_35] : memref<9x128xf32, #tpu.memory_space<vmem>>, vector<1x128xf32>
    %92 = vector.broadcast %91 : vector<1x128xf32> to vector<24x128xf32>
    %93 = arith.addf %90, %92 : vector<24x128xf32>
    %c2_36 = arith.constant 2 : index
    %94 = memref.load %arg4[%c2_36] : memref<6xf32, #tpu.memory_space<smem>>
    %cst_37 = arith.constant 0.000000e+00 : f32
    %95 = vector.broadcast %cst_37 : f32 to vector<24x128xf32>
    %96 = arith.cmpf ogt, %93, %95 : vector<24x128xf32>
    %97 = vector.broadcast %94 : f32 to vector<24x128xf32>
    %98 = arith.mulf %97, %93 : vector<24x128xf32>
    %99 = arith.select %96, %93, %98 : vector<24x128xi1>, vector<24x128xf32>
    %c4 = arith.constant 4 : index
    %c0_38 = arith.constant 0 : index
    %c0_39 = arith.constant 0 : index
    %100 = vector.load %arg2[%c4, %c0_38, %c0_39] : memref<10x128x128xbf16, #tpu.memory_space<vmem>>, vector<1x128x128xbf16>
    %101 = vector.shape_cast %100 : vector<1x128x128xbf16> to vector<128x128xbf16>
    %102 = arith.truncf %99 : vector<24x128xf32> to vector<24x128xbf16>
    %cst_40 = arith.constant dense<0.000000e+00> : vector<24x128xf32>
    %103 = tpu.matmul %102, %101, %cst_40 {dimension_numbers = #tpu.dot_dimension_numbers<[1], [0], [0], [1], [0, 0, 1, 1], [], []>} : vector<24x128xbf16>, vector<128x128xbf16>, vector<24x128xf32> -> vector<24x128xf32>
    %c4_41 = arith.constant 4 : index
    %c0_42 = arith.constant 0 : index
    %104 = vector.load %arg3[%c4_41, %c0_42] : memref<9x128xf32, #tpu.memory_space<vmem>>, vector<1x128xf32>
    %105 = vector.broadcast %104 : vector<1x128xf32> to vector<24x128xf32>
    %106 = arith.addf %103, %105 : vector<24x128xf32>
    %c5 = arith.constant 5 : index
    %c0_43 = arith.constant 0 : index
    %c0_44 = arith.constant 0 : index
    %107 = vector.load %arg2[%c5, %c0_43, %c0_44] : memref<10x128x128xbf16, #tpu.memory_space<vmem>>, vector<1x128x128xbf16>
    %108 = vector.shape_cast %107 : vector<1x128x128xbf16> to vector<128x128xbf16>
    %109 = arith.truncf %86 : vector<24x128xf32> to vector<24x128xbf16>
    %cst_45 = arith.constant dense<0.000000e+00> : vector<24x128xf32>
    %110 = tpu.matmul %109, %108, %cst_45 {dimension_numbers = #tpu.dot_dimension_numbers<[1], [0], [0], [1], [0, 0, 1, 1], [], []>} : vector<24x128xbf16>, vector<128x128xbf16>, vector<24x128xf32> -> vector<24x128xf32>
    %111 = arith.addf %106, %110 : vector<24x128xf32>
    %c3_46 = arith.constant 3 : index
    %112 = memref.load %arg4[%c3_46] : memref<6xf32, #tpu.memory_space<smem>>
    %cst_47 = arith.constant 0.000000e+00 : f32
    %113 = vector.broadcast %cst_47 : f32 to vector<24x128xf32>
    %114 = arith.cmpf ogt, %111, %113 : vector<24x128xf32>
    %115 = vector.broadcast %112 : f32 to vector<24x128xf32>
    %116 = arith.mulf %115, %111 : vector<24x128xf32>
    %117 = arith.select %114, %111, %116 : vector<24x128xi1>, vector<24x128xf32>
    %118 = tpu.iota {dimensions = array<i32: 0>} : vector<8x24xi32>
    %119 = tpu.iota {dimensions = array<i32: 1>} : vector<8x24xi32>
    %c3_i32_48 = arith.constant 3 : i32
    %120 = vector.broadcast %c3_i32_48 : i32 to vector<8x24xi32>
    %121 = arith.muli %120, %118 : vector<8x24xi32>
    %c0_i32_49 = arith.constant 0 : i32
    %122 = vector.broadcast %c0_i32_49 : i32 to vector<8x24xi32>
    %123 = arith.addi %121, %122 : vector<8x24xi32>
    %124 = arith.cmpi eq, %119, %123 : vector<8x24xi32>
    %125 = arith.extui %124 : vector<8x24xi1> to vector<8x24xi32>
    %126 = arith.sitofp %125 : vector<8x24xi32> to vector<8x24xf32>
    %cst_50 = arith.constant dense<0.000000e+00> : vector<8x128xf32>
    %127 = tpu.matmul %126, %117, %cst_50 {dimension_numbers = #tpu.dot_dimension_numbers<[1], [0], [0], [1], [0, 0, 1, 1], [], []>} : vector<8x24xf32>, vector<24x128xf32>, vector<8x128xf32> -> vector<8x128xf32>
    %c3_i32_51 = arith.constant 3 : i32
    %128 = vector.broadcast %c3_i32_51 : i32 to vector<8x24xi32>
    %129 = arith.muli %128, %118 : vector<8x24xi32>
    %c1_i32_52 = arith.constant 1 : i32
    %130 = vector.broadcast %c1_i32_52 : i32 to vector<8x24xi32>
    %131 = arith.addi %129, %130 : vector<8x24xi32>
    %132 = arith.cmpi eq, %119, %131 : vector<8x24xi32>
    %133 = arith.extui %132 : vector<8x24xi1> to vector<8x24xi32>
    %134 = arith.sitofp %133 : vector<8x24xi32> to vector<8x24xf32>
    %cst_53 = arith.constant dense<0.000000e+00> : vector<8x128xf32>
    %135 = tpu.matmul %134, %117, %cst_53 {dimension_numbers = #tpu.dot_dimension_numbers<[1], [0], [0], [1], [0, 0, 1, 1], [], []>} : vector<8x24xf32>, vector<24x128xf32>, vector<8x128xf32> -> vector<8x128xf32>
    %136 = arith.maximumf %127, %135 : vector<8x128xf32>
    %c3_i32_54 = arith.constant 3 : i32
    %137 = vector.broadcast %c3_i32_54 : i32 to vector<8x24xi32>
    %138 = arith.muli %137, %118 : vector<8x24xi32>
    %c2_i32_55 = arith.constant 2 : i32
    %139 = vector.broadcast %c2_i32_55 : i32 to vector<8x24xi32>
    %140 = arith.addi %138, %139 : vector<8x24xi32>
    %141 = arith.cmpi eq, %119, %140 : vector<8x24xi32>
    %142 = arith.extui %141 : vector<8x24xi1> to vector<8x24xi32>
    %143 = arith.sitofp %142 : vector<8x24xi32> to vector<8x24xf32>
    %cst_56 = arith.constant dense<0.000000e+00> : vector<8x128xf32>
    %144 = tpu.matmul %143, %117, %cst_56 {dimension_numbers = #tpu.dot_dimension_numbers<[1], [0], [0], [1], [0, 0, 1, 1], [], []>} : vector<8x24xf32>, vector<24x128xf32>, vector<8x128xf32> -> vector<8x128xf32>
    %145 = arith.maximumf %136, %144 : vector<8x128xf32>
    %c6 = arith.constant 6 : index
    %c0_57 = arith.constant 0 : index
    %c0_58 = arith.constant 0 : index
    %146 = vector.load %arg2[%c6, %c0_57, %c0_58] : memref<10x128x128xbf16, #tpu.memory_space<vmem>>, vector<1x128x128xbf16>
    %147 = vector.shape_cast %146 : vector<1x128x128xbf16> to vector<128x128xbf16>
    %148 = arith.truncf %145 : vector<8x128xf32> to vector<8x128xbf16>
    %cst_59 = arith.constant dense<0.000000e+00> : vector<8x128xf32>
    %149 = tpu.matmul %148, %147, %cst_59 {dimension_numbers = #tpu.dot_dimension_numbers<[1], [0], [0], [1], [0, 0, 1, 1], [], []>} : vector<8x128xbf16>, vector<128x128xbf16>, vector<8x128xf32> -> vector<8x128xf32>
    %c5_60 = arith.constant 5 : index
    %c0_61 = arith.constant 0 : index
    %150 = vector.load %arg3[%c5_60, %c0_61] : memref<9x128xf32, #tpu.memory_space<vmem>>, vector<1x128xf32>
    %151 = vector.broadcast %150 : vector<1x128xf32> to vector<8x128xf32>
    %152 = arith.addf %149, %151 : vector<8x128xf32>
    %c4_62 = arith.constant 4 : index
    %153 = memref.load %arg4[%c4_62] : memref<6xf32, #tpu.memory_space<smem>>
    %cst_63 = arith.constant 0.000000e+00 : f32
    %154 = vector.broadcast %cst_63 : f32 to vector<8x128xf32>
    %155 = arith.cmpf ogt, %152, %154 : vector<8x128xf32>
    %156 = vector.broadcast %153 : f32 to vector<8x128xf32>
    %157 = arith.mulf %156, %152 : vector<8x128xf32>
    %158 = arith.select %155, %152, %157 : vector<8x128xi1>, vector<8x128xf32>
    %c7 = arith.constant 7 : index
    %c0_64 = arith.constant 0 : index
    %c0_65 = arith.constant 0 : index
    %159 = vector.load %arg2[%c7, %c0_64, %c0_65] : memref<10x128x128xbf16, #tpu.memory_space<vmem>>, vector<1x128x128xbf16>
    %160 = vector.shape_cast %159 : vector<1x128x128xbf16> to vector<128x128xbf16>
    %161 = arith.truncf %158 : vector<8x128xf32> to vector<8x128xbf16>
    %cst_66 = arith.constant dense<0.000000e+00> : vector<8x128xf32>
    %162 = tpu.matmul %161, %160, %cst_66 {dimension_numbers = #tpu.dot_dimension_numbers<[1], [0], [0], [1], [0, 0, 1, 1], [], []>} : vector<8x128xbf16>, vector<128x128xbf16>, vector<8x128xf32> -> vector<8x128xf32>
    %c6_67 = arith.constant 6 : index
    %c0_68 = arith.constant 0 : index
    %163 = vector.load %arg3[%c6_67, %c0_68] : memref<9x128xf32, #tpu.memory_space<vmem>>, vector<1x128xf32>
    %164 = vector.broadcast %163 : vector<1x128xf32> to vector<8x128xf32>
    %165 = arith.addf %162, %164 : vector<8x128xf32>
    %166 = arith.addf %165, %145 : vector<8x128xf32>
    %c5_69 = arith.constant 5 : index
    %167 = memref.load %arg4[%c5_69] : memref<6xf32, #tpu.memory_space<smem>>
    %cst_70 = arith.constant 0.000000e+00 : f32
    %168 = vector.broadcast %cst_70 : f32 to vector<8x128xf32>
    %169 = arith.cmpf ogt, %166, %168 : vector<8x128xf32>
    %170 = vector.broadcast %167 : f32 to vector<8x128xf32>
    %171 = arith.mulf %170, %166 : vector<8x128xf32>
    %172 = arith.select %169, %166, %171 : vector<8x128xi1>, vector<8x128xf32>
    %173 = tpu.iota {dimensions = array<i32: 0>} : vector<2x8xi32>
    %174 = tpu.iota {dimensions = array<i32: 1>} : vector<2x8xi32>
    %c3_i32_71 = arith.constant 3 : i32
    %175 = vector.broadcast %c3_i32_71 : i32 to vector<2x8xi32>
    %176 = arith.muli %175, %173 : vector<2x8xi32>
    %c0_i32_72 = arith.constant 0 : i32
    %177 = vector.broadcast %c0_i32_72 : i32 to vector<2x8xi32>
    %178 = arith.addi %176, %177 : vector<2x8xi32>
    %179 = arith.cmpi eq, %174, %178 : vector<2x8xi32>
    %180 = arith.extui %179 : vector<2x8xi1> to vector<2x8xi32>
    %181 = arith.sitofp %180 : vector<2x8xi32> to vector<2x8xf32>
    %cst_73 = arith.constant dense<0.000000e+00> : vector<2x128xf32>
    %182 = tpu.matmul %181, %172, %cst_73 {dimension_numbers = #tpu.dot_dimension_numbers<[1], [0], [0], [1], [0, 0, 1, 1], [], []>} : vector<2x8xf32>, vector<8x128xf32>, vector<2x128xf32> -> vector<2x128xf32>
    %c3_i32_74 = arith.constant 3 : i32
    %183 = vector.broadcast %c3_i32_74 : i32 to vector<2x8xi32>
    %184 = arith.muli %183, %173 : vector<2x8xi32>
    %c1_i32_75 = arith.constant 1 : i32
    %185 = vector.broadcast %c1_i32_75 : i32 to vector<2x8xi32>
    %186 = arith.addi %184, %185 : vector<2x8xi32>
    %187 = arith.cmpi eq, %174, %186 : vector<2x8xi32>
    %188 = arith.extui %187 : vector<2x8xi1> to vector<2x8xi32>
    %189 = arith.sitofp %188 : vector<2x8xi32> to vector<2x8xf32>
    %cst_76 = arith.constant dense<0.000000e+00> : vector<2x128xf32>
    %190 = tpu.matmul %189, %172, %cst_76 {dimension_numbers = #tpu.dot_dimension_numbers<[1], [0], [0], [1], [0, 0, 1, 1], [], []>} : vector<2x8xf32>, vector<8x128xf32>, vector<2x128xf32> -> vector<2x128xf32>
    %191 = arith.maximumf %182, %190 : vector<2x128xf32>
    %c3_i32_77 = arith.constant 3 : i32
    %192 = vector.broadcast %c3_i32_77 : i32 to vector<2x8xi32>
    %193 = arith.muli %192, %173 : vector<2x8xi32>
    %c2_i32_78 = arith.constant 2 : i32
    %194 = vector.broadcast %c2_i32_78 : i32 to vector<2x8xi32>
    %195 = arith.addi %193, %194 : vector<2x8xi32>
    %196 = arith.cmpi eq, %174, %195 : vector<2x8xi32>
    %197 = arith.extui %196 : vector<2x8xi1> to vector<2x8xi32>
    %198 = arith.sitofp %197 : vector<2x8xi32> to vector<2x8xf32>
    %cst_79 = arith.constant dense<0.000000e+00> : vector<2x128xf32>
    %199 = tpu.matmul %198, %172, %cst_79 {dimension_numbers = #tpu.dot_dimension_numbers<[1], [0], [0], [1], [0, 0, 1, 1], [], []>} : vector<2x8xf32>, vector<8x128xf32>, vector<2x128xf32> -> vector<2x128xf32>
    %200 = arith.maximumf %191, %199 : vector<2x128xf32>
    %c8 = arith.constant 8 : index
    %c0_80 = arith.constant 0 : index
    %c0_81 = arith.constant 0 : index
    %201 = vector.load %arg2[%c8, %c0_80, %c0_81] : memref<10x128x128xbf16, #tpu.memory_space<vmem>>, vector<1x128x128xbf16>
    %202 = vector.shape_cast %201 : vector<1x128x128xbf16> to vector<128x128xbf16>
    %203 = arith.truncf %200 : vector<2x128xf32> to vector<2x128xbf16>
    %cst_82 = arith.constant dense<0.000000e+00> : vector<2x128xf32>
    %204 = tpu.matmul %203, %202, %cst_82 {dimension_numbers = #tpu.dot_dimension_numbers<[1], [0], [0], [1], [0, 0, 1, 1], [], []>} : vector<2x128xbf16>, vector<128x128xbf16>, vector<2x128xf32> -> vector<2x128xf32>
    %c7_83 = arith.constant 7 : index
    %c0_84 = arith.constant 0 : index
    %205 = vector.load %arg3[%c7_83, %c0_84] : memref<9x128xf32, #tpu.memory_space<vmem>>, vector<1x128xf32>
    %206 = vector.broadcast %205 : vector<1x128xf32> to vector<2x128xf32>
    %207 = arith.addf %204, %206 : vector<2x128xf32>
    %cst_85 = arith.constant dense<0.000000e+00> : vector<128xf32>
    %208 = vector.multi_reduction <add>, %207, %cst_85 [0] : vector<2x128xf32> to vector<128xf32>
    %209 = vector.shape_cast %208 : vector<128xf32> to vector<1x128xf32>
    %cst_86 = arith.constant 2.000000e+00 : f32
    %210 = vector.broadcast %cst_86 : f32 to vector<1x128xf32>
    %211 = arith.divf %209, %210 : vector<1x128xf32>
    %c0_87 = arith.constant 0 : index
    %c0_88 = arith.constant 0 : index
    %c0_89 = arith.constant 0 : index
    %212 = vector.load %arg5[%c0_87, %c0_88, %c0_89] : memref<1x1x128xf32, #tpu.memory_space<vmem>>, vector<1x1x128xf32>
    %213 = vector.shape_cast %212 : vector<1x1x128xf32> to vector<1x128xf32>
    %214 = vector.shape_cast %211 : vector<1x128xf32> to vector<1x1x128xf32>
    tpu.vector_store %arg5[%c0_87, %c0_88, %c0_89], %214 {strides = array<i32>} : memref<1x1x128xf32, #tpu.memory_space<vmem>>, vector<1x1x128xf32>,
    %c9 = arith.constant 9 : index
    %c0_90 = arith.constant 0 : index
    %c0_91 = arith.constant 0 : index
    %215 = vector.load %arg2[%c9, %c0_90, %c0_91] : memref<10x128x128xbf16, #tpu.memory_space<vmem>>, vector<1x128x128xbf16>
    %216 = vector.shape_cast %215 : vector<1x128x128xbf16> to vector<128x128xbf16>
    %217 = arith.truncf %211 : vector<1x128xf32> to vector<1x128xbf16>
    %cst_92 = arith.constant dense<0.000000e+00> : vector<1x128xf32>
    %218 = tpu.matmul %217, %216, %cst_92 {dimension_numbers = #tpu.dot_dimension_numbers<[1], [0], [0], [1], [0, 0, 1, 1], [], []>} : vector<1x128xbf16>, vector<128x128xbf16>, vector<1x128xf32> -> vector<1x128xf32>
    %c8_93 = arith.constant 8 : index
    %c0_94 = arith.constant 0 : index
    %219 = vector.load %arg3[%c8_93, %c0_94] : memref<9x128xf32, #tpu.memory_space<vmem>>, vector<1x128xf32>
    %220 = arith.addf %218, %219 : vector<1x128xf32>
    %c0_95 = arith.constant 0 : index
    %c0_96 = arith.constant 0 : index
    %c0_97 = arith.constant 0 : index
    %221 = vector.load %arg6[%c0_95, %c0_96, %c0_97] : memref<1x1x128xf32, #tpu.memory_space<vmem>>, vector<1x1x128xf32>
    %222 = vector.shape_cast %221 : vector<1x1x128xf32> to vector<1x128xf32>
    %223 = vector.shape_cast %220 : vector<1x128xf32> to vector<1x1x128xf32>
    tpu.vector_store %arg6[%c0_95, %c0_96, %c0_97], %223 {strides = array<i32>} : memref<1x1x128xf32, #tpu.memory_space<vmem>>, vector<1x1x128xf32>,
    return
  }
  func.func @transform_0(%arg0: i32) -> (i32, i32, i32) {
    %c0_i32 = arith.constant 0 : i32
    %c0_i32_0 = arith.constant 0 : i32
    %c0_i32_1 = arith.constant 0 : i32
    return %arg0, %c0_i32, %c0_i32_0 : i32, i32, i32
  }
  func.func @transform_1(%arg0: i32) -> (i32, i32, i32) {
    %c0_i32 = arith.constant 0 : i32
    %c0_i32_0 = arith.constant 0 : i32
    %c0_i32_1 = arith.constant 0 : i32
    %c0_i32_2 = arith.constant 0 : i32
    return %c0_i32, %c0_i32_0, %c0_i32_1 : i32, i32, i32
  }
  func.func @transform_2(%arg0: i32) -> (i32, i32) {
    %c0_i32 = arith.constant 0 : i32
    %c0_i32_0 = arith.constant 0 : i32
    %c0_i32_1 = arith.constant 0 : i32
    return %c0_i32, %c0_i32_0 : i32, i32
  }
  func.func @transform_3(%arg0: i32) -> i32 {
    %c0_i32 = arith.constant 0 : i32
    %c0_i32_0 = arith.constant 0 : i32
    return %c0_i32 : i32
  }
  func.func @transform_4(%arg0: i32) -> (i32, i32, i32) {
    %c0_i32 = arith.constant 0 : i32
    %c0_i32_0 = arith.constant 0 : i32
    %c0_i32_1 = arith.constant 0 : i32
    return %arg0, %c0_i32, %c0_i32_0 : i32, i32, i32
  }
  func.func @transform_5(%arg0: i32) -> (i32, i32, i32) {
    %c0_i32 = arith.constant 0 : i32
    %c0_i32_0 = arith.constant 0 : i32
    %c0_i32_1 = arith.constant 0 : i32
    return %arg0, %c0_i32, %c0_i32_0 : i32, i32, i32
  }
}

</mosaic_0001>

<llo_original>
// kernel: speaker_encoder_short.1
$region0: #{speaker_encoder_short.1}
  #allocation0 [shape = 'u32[]', space=smem, size = 0x4, offset = 0x4, fixed_abs, tag = 'smem constant byte address 0x4 - core index']
  #allocation1 [shape = 'u32[144,128]{1,0:T(1,128)}', space=vmem, size = 0x12000, scoped, tag = 'internal scratch']
  %s0 = inlined_call_operand.vmem [shape: f32[2,72,128], index: 0, kind: input, shape index: {}]
  %s1 = inlined_call_operand.hbm [shape: bf16[10,128,128], index: 1, kind: input, shape index: {}]
  %s2 = inlined_call_operand.vmem [shape: f32[9,128], index: 2, kind: input, shape index: {}]
  %s3 = inlined_call_operand.vmem [shape: f32[6], index: 3, kind: input, shape index: {}]
  %s4 = inlined_call_operand.hbm [shape: f32[2,1,128], index: 4, kind: output, shape index: {0}]
  %s5 = inlined_call_operand.hbm [shape: f32[2,1,128], index: 5, kind: output, shape index: {1}]
  %6 = xla_tuple %s4, %s5
  %s7 = sld [smem:[#allocation0]]
  $region65: #{speaker_encoder_short.1} parent=0
    _
  %s9 = ssub.s32 1, %s7
  %s10 = scalar_select 0, %s9, %s7
  $region1: #{speaker_encoder_short.1} parent=0
    #allocation2 [shape = 'u8[327680]{0}', space=vmem, size = 0x50000, scoped, tag = 'input window, operand 1, single buffered']
    #allocation3 [shape = 's32[2]{0}', space=sflag, size = 0x8, scoped, tag = 'scoped memory for speaker_encoder_short.1']
    #allocation4 [shape = 's32[2]{0}', space=sflag, size = 0x8, scoped, tag = 'scoped memory for speaker_encoder_short.1']
    #allocation5 [shape = 's32[2]{0}', space=sflag, size = 0x8, scoped, tag = 'scoped memory for speaker_encoder_short.1']
    #allocation6 [shape = 'u8[512]{0}', space=smem, size = 0x200, scoped, tag = 'input window, operand 3, single buffered']
    #allocation7 [shape = 'u8[1024]{0}', space=vmem, size = 0x400, scoped, tag = 'output window, operand 0']
    #allocation8 [shape = 'u8[1024]{0}', space=vmem, size = 0x400, scoped, tag = 'output window, operand 1']
    #allocation9 [shape = 's32[2]{0}', space=sflag, size = 0x8, scoped, tag = 'scoped memory for speaker_encoder_short.1']
    %11 = vsyncpa [#allocation3], 0
    %12 = vsyncpa [#allocation5], 0
    %13 = vsyncpa [#allocation4], 0
    %s14 = scalar_lea.sflag [#allocation4], 1
    %15 = vsyncpa %s14, 0
    %16 = vsyncpa [#allocation9], 0
    %s17 = scalar_lea.sflag [#allocation9], 1
    %18 = vsyncpa %s17, 0
    loop: start=0, step=1, limit=4
    $region2: #{speaker_encoder_short.1} parent=1 // loop_pre_header
      _
    $region3: #{speaker_encoder_short.1} parent=1 // loop_header
      %s20 = sphi 0, %s24
      %p21 = scmp.ge.s32.totalorder %s20, 4
      %s30 = sphi 0, %s32
      %s33 = sphi 0, %s30
      %s34 = sphi 0, %s33
      %s50 = sphi 0, %s34
      %s54 = sphi 0, %s54
      %s56 = sphi 0, %s54
      %s57 = sphi 0, %s56
      %s71 = sphi 0, %s57
      %s75 = sphi 0, %s75
      %s77 = sphi 0, %s75
      %s78 = sphi 0, %s77
      %s92 = sphi 0, %s78
      %s96 = sphi 0, %s96
      %s98 = sphi 0, %s96
      %s99 = sphi 0, %s98
      %s113 = sphi 0, %s99
      %s119 = sphi 0, %s121
      %s122 = sphi 0, %s119
      %s123 = sphi 0, %s122
      %s139 = sphi 0, %s123
      %s145 = sphi 0, %s147
      %s148 = sphi 0, %s145
      %s149 = sphi 0, %s148
      %s165 = sphi 0, %s149
    $region4: #{speaker_encoder_short.1} parent=1 // loop_header_branch
      %23 = sbr.rel (%p21) target = $region8
    $region5: #{speaker_encoder_short.1} parent=1 // loop_body
      %s25 = ssub.s32 %s20, 1
      %s26 = ssub.s32 %s20, 2
      %s27 = sadd.s32 %s20, 1
      %s28 = ssub.s32 %s20, %s27
      %p29 = scmp.eq.s32.totalorder %s28, 0
      %s31 = sadd.s32 %s30, 1
      %s32 = scalar_select %p29, %s30, %s31
      %p35 = pneg %p29
      %p36 = scmp.eq.s32.totalorder %s20, 1
      %p37 = por %p35, %p36
      %p38 = scmp.ne.s32.totalorder %s30, %s33
      %p39 = scmp.eq.s32.totalorder %s20, 0
      %p40 = por %p38, %p39
      %p41 = scmp.ne.s32.totalorder %s30, %s33
      %p42 = scmp.eq.s32.totalorder %s25, 1
      %p43 = por %p41, %p42
      %p44 = scmp.ne.s32.totalorder %s33, %s34
      %p45 = scmp.eq.s32.totalorder %s25, 0
      %p46 = por %p44, %p45
      %p47 = scmp.ne.s32.totalorder %s33, %s34
      %p48 = scmp.eq.s32.totalorder %s26, 1
      %p49 = por %p47, %p48
      %p51 = scmp.ne.s32.totalorder %s34, %s50
      %p52 = scmp.eq.s32.totalorder %s26, 0
      %p53 = por %p51, %p52
      %s55 = sadd.s32 %s54, 1
      %p58 = scmp.eq.s32.totalorder %s20, 1
      %p59 = scmp.ne.s32.totalorder %s54, %s56
      %p60 = scmp.eq.s32.totalorder %s20, 0
      %p61 = por %p59, %p60
      %p62 = scmp.ne.s32.totalorder %s54, %s56
      %p63 = scmp.eq.s32.totalorder %s25, 1
      %p64 = por %p62, %p63
      %p65 = scmp.ne.s32.totalorder %s56, %s57
      %p66 = scmp.eq.s32.totalorder %s25, 0
      %p67 = por %p65, %p66
      %p68 = scmp.ne.s32.totalorder %s56, %s57
      %p69 = scmp.eq.s32.totalorder %s26, 1
      %p70 = por %p68, %p69
      %p72 = scmp.ne.s32.totalorder %s57, %s71
      %p73 = scmp.eq.s32.totalorder %s26, 0
      %p74 = por %p72, %p73
      %s76 = sadd.s32 %s75, 1
      %p79 = scmp.eq.s32.totalorder %s20, 1
      %p80 = scmp.ne.s32.totalorder %s75, %s77
      %p81 = scmp.eq.s32.totalorder %s20, 0
      %p82 = por %p80, %p81
      %p83 = scmp.ne.s32.totalorder %s75, %s77
      %p84 = scmp.eq.s32.totalorder %s25, 1
      %p85 = por %p83, %p84
      %p86 = scmp.ne.s32.totalorder %s77, %s78
      %p87 = scmp.eq.s32.totalorder %s25, 0
      %p88 = por %p86, %p87
      %p89 = scmp.ne.s32.totalorder %s77, %s78
      %p90 = scmp.eq.s32.totalorder %s26, 1
      %p91 = por %p89, %p90
      %p93 = scmp.ne.s32.totalorder %s78, %s92
      %p94 = scmp.eq.s32.totalorder %s26, 0
      %p95 = por %p93, %p94
      %s97 = sadd.s32 %s96, 1
      %p100 = scmp.eq.s32.totalorder %s20, 1
      %p101 = scmp.ne.s32.totalorder %s96, %s98
      %p102 = scmp.eq.s32.totalorder %s20, 0
      %p103 = por %p101, %p102
      %p104 = scmp.ne.s32.totalorder %s96, %s98
      %p105 = scmp.eq.s32.totalorder %s25, 1
      %p106 = por %p104, %p105
      %p107 = scmp.ne.s32.totalorder %s98, %s99
      %p108 = scmp.eq.s32.totalorder %s25, 0
      %p109 = por %p107, %p108
      %p110 = scmp.ne.s32.totalorder %s98, %s99
      %p111 = scmp.eq.s32.totalorder %s26, 1
      %p112 = por %p110, %p111
      %p114 = scmp.ne.s32.totalorder %s99, %s113
      %p115 = scmp.eq.s32.totalorder %s26, 0
      %p116 = por %p114, %p115
      %s117 = ssub.s32 %s20, %s27
      %p118 = scmp.eq.s32.totalorder %s117, 0
      %s120 = sadd.s32 %s119, 1
      %s121 = scalar_select %p118, %s119, %s120
      %p124 = pneg %p118
      %p125 = scmp.eq.s32.totalorder %s20, 1
      %p126 = por %p124, %p125
      %p127 = scmp.ne.s32.totalorder %s119, %s122
      %p128 = scmp.eq.s32.totalorder %s20, 0
      %p129 = por %p127, %p128
      %p130 = scmp.ne.s32.totalorder %s119, %s122
      %p131 = scmp.eq.s32.totalorder %s25, 1
      %p132 = por %p130, %p131
      %p133 = scmp.ne.s32.totalorder %s122, %s123
      %p134 = scmp.eq.s32.totalorder %s25, 0
      %p135 = por %p133, %p134
      %p136 = scmp.ne.s32.totalorder %s122, %s123
      %p137 = scmp.eq.s32.totalorder %s26, 1
      %p138 = por %p136, %p137
      %p140 = scmp.ne.s32.totalorder %s123, %s139
      %p141 = scmp.eq.s32.totalorder %s26, 0
      %p142 = por %p140, %p141
      %s143 = ssub.s32 %s20, %s27
      %p144 = scmp.eq.s32.totalorder %s143, 0
      %s146 = sadd.s32 %s145, 1
      %s147 = scalar_select %p144, %s145, %s146
      %p150 = pneg %p144
      %p151 = scmp.eq.s32.totalorder %s20, 1
      %p152 = por %p150, %p151
      %p153 = scmp.ne.s32.totalorder %s145, %s148
      %p154 = scmp.eq.s32.totalorder %s20, 0
      %p155 = por %p153, %p154
      %p156 = scmp.ne.s32.totalorder %s145, %s148
      %p157 = scmp.eq.s32.totalorder %s25, 1
      %p158 = por %p156, %p157
      %p159 = scmp.ne.s32.totalorder %s148, %s149
      %p160 = scmp.eq.s32.totalorder %s25, 0
      %p161 = por %p159, %p160
      %p162 = scmp.ne.s32.totalorder %s148, %s149
      %p163 = scmp.eq.s32.totalorder %s26, 1
      %p164 = por %p162, %p163
      %p166 = scmp.ne.s32.totalorder %s149, %s165
      %p167 = scmp.eq.s32.totalorder %s26, 0
      %p168 = por %p166, %p167
      %p169 = scmp.le.s32.totalorder 1, %s20
      %p170 = scmp.lt.s32.totalorder %s20, 3
      %p171 = pnand %p169, %p170
      %p172 = pneg %p171
      // Predicated region
      $region9: #{speaker_encoder_short.1} parent=5 // pred_check
        _
      $region10: #{speaker_encoder_short.1} parent=5 // pred_check_branch
        %174 = sbr.rel (%p171) target = $region12
      $region11: #{speaker_encoder_short.1} parent=5 // pred_region
        %s175 = ssub.s32 %s20, 1
        // Predicated region
        $region13: #{speaker_encoder_short.1} parent=11 // pred_check
          %p176 = pneg %p67
        $region14: #{speaker_encoder_short.1} parent=11 // pred_check_branch
          %178 = sbr.rel (%p176) target = $region16
        $region15: #{speaker_encoder_short.1} parent=11 // pred_region
          %s180 = ssub.s32 10240, 10240
          %181 = vsyncadd [#allocation3], %s180
          %s182 = sshll.u32 [#allocation2], 4
          %s183 = int_to_ptr.vmem [resolvable:$true] %s182
          %188 = dma.hbm_to_vmem [thread:$0]  %s1, 10240, %s183, [#allocation3], 64, 64, 4
        $region16: #{speaker_encoder_short.1} parent=11 // pred_fallthru
          _
        // Predicated region
        $region17: #{speaker_encoder_short.1} parent=11 // pred_check
          %p189 = pneg %p88
        $region18: #{speaker_encoder_short.1} parent=11 // pred_check_branch
          %191 = sbr.rel (%p189) target = $region20
        $region19: #{speaker_encoder_short.1} parent=11 // pred_region
          _
        $region20: #{speaker_encoder_short.1} parent=11 // pred_fallthru
          _
        // Predicated region
        $region21: #{speaker_encoder_short.1} parent=11 // pred_check
          %p192 = pneg %p109
        $region22: #{speaker_encoder_short.1} parent=11 // pred_check_branch
          %194 = sbr.rel (%p192) target = $region24
        $region23: #{speaker_encoder_short.1} parent=11 // pred_region
          %s196 = ssub.s32 16, 16
          %197 = vsyncadd [#allocation5], %s196
          %s199 = sshll.u32 %s3, 4
          %s200 = int_to_ptr.vmem [resolvable:$true] %s199
          %202 = dma.vmem_to_smem %s200, 16, [#allocation6], [#allocation5]
        $region24: #{speaker_encoder_short.1} parent=11 // pred_fallthru
          _
      $region12: #{speaker_encoder_short.1} parent=5 // pred_fallthru
        _
      %p203 = scmp.lt.s32.totalorder %s20, 2
      // Predicated region
      $region25: #{speaker_encoder_short.1} parent=5 // pred_check
        %p204 = pneg %p203
      $region26: #{speaker_encoder_short.1} parent=5 // pred_check_branch
        %206 = sbr.rel (%p204) target = $region28
      $region27: #{speaker_encoder_short.1} parent=5 // pred_region
        // Predicated region
        $region29: #{speaker_encoder_short.1} parent=27 // pred_check
          %p207 = pneg %p40
        $region30: #{speaker_encoder_short.1} parent=27 // pred_check_branch
          %209 = sbr.rel (%p207) target = $region32
        $region31: #{speaker_encoder_short.1} parent=27 // pred_region
          %p210 = scmp.lt.s32.totalorder %s20, 1
          %s211 = scalar_select %p210, %s20, 1
          %s212 = smul.addr %s211, 9
          %s213 = smul.addr %s212, 8
          %s214 = scalar_lea.vmem %s0, %s213
        $region32: #{speaker_encoder_short.1} parent=27 // pred_fallthru
          _
      $region28: #{speaker_encoder_short.1} parent=5 // pred_fallthru
        _
      %p215 = scmp.le.s32.totalorder 1, %s20
      %p216 = scmp.lt.s32.totalorder %s20, 3
      %p217 = pnand %p215, %p216
      %p218 = pneg %p217
      // Predicated region
      $region33: #{speaker_encoder_short.1} parent=5 // pred_check
        _
      $region34: #{speaker_encoder_short.1} parent=5 // pred_check_branch
        %220 = sbr.rel (%p217) target = $region36
      $region35: #{speaker_encoder_short.1} parent=5 // pred_region
        %s221 = ssub.s32 %s20, 1
        // Predicated region
        $region37: #{speaker_encoder_short.1} parent=35 // pred_check
          %p222 = pneg %p67
        $region38: #{speaker_encoder_short.1} parent=35 // pred_check_branch
          %224 = sbr.rel (%p222) target = $region40
        $region39: #{speaker_encoder_short.1} parent=35 // pred_region
          %225 = dma.done [#allocation3], 10240
        $region40: #{speaker_encoder_short.1} parent=35 // pred_fallthru
          _
        // Predicated region
        $region41: #{speaker_encoder_short.1} parent=35 // pred_check
          %p226 = pneg %p109
        $region42: #{speaker_encoder_short.1} parent=35 // pred_check_branch
          %228 = sbr.rel (%p226) target = $region44
        $region43: #{speaker_encoder_short.1} parent=35 // pred_region
          %229 = dma.done [#allocation5], 16
        $region44: #{speaker_encoder_short.1} parent=35 // pred_fallthru
          _
        %230 = sfence
        %p231 = scmp.lt.s32.totalorder %s25, 1
        %s232 = scalar_select %p231, %s25, 1
        %s233 = smul.addr %s232, 9
        %s234 = smul.addr %s233, 8
        %s235 = scalar_lea.vmem %s0, %s234
        %p236 = pneg %p46
        %p237 = pneg %p43
        %p238 = pneg %p67
        %p239 = pneg %p64
        %p240 = pneg %p88
        %p241 = pneg %p85
        %p242 = pneg %p109
        %p243 = pneg %p106
        %p244 = pneg %p135
        %p245 = pneg %p132
        %s246 = sand.u32 %s122, 1
        %s247 = scalar_lea.sflag [#allocation4], %s246
        %s248 = sand.u32 %s122, 1
        %s249 = scalar_lea.vmem [#allocation7], %s248
        %p250 = pneg %p161
        %p251 = pneg %p158
        %s252 = sand.u32 %s148, 1
        %s253 = scalar_lea.sflag [#allocation9], %s252
        %s254 = sand.u32 %s148, 1
        %s255 = scalar_lea.vmem [#allocation8], %s254
        %p256 = scmp.lt.s32.totalorder %s25, 1
        %s257 = scalar_select %p256, %s25, 1
        %s258 = smul.addr %s257, 9
        %s259 = smul.addr %s258, 8
        %s260 = scalar_lea.vmem %s0, %s259
        %v262 = vld [vmem:[%s260] sm:$0xff]
        %v263 = vld [vmem:[%s260 + $0x8] sm:$0xff]
        %v264 = vld [vmem:[%s260 + $0x10] sm:$0xff]
        %v265 = vld [vmem:[%s260 + $0x18] sm:$0xff]
        %v266 = vld [vmem:[%s260 + $0x20] sm:$0xff]
        %v267 = vld [vmem:[%s260 + $0x28] sm:$0xff]
        %v268 = vld [vmem:[%s260 + $0x30] sm:$0xff]
        %v269 = vld [vmem:[%s260 + $0x38] sm:$0xff]
        %v270 = vld [vmem:[%s260 + $0x40] sm:$0xff]
        %v271 = vlaneseq
        %v272 = vand.u32 %v271, 127
        %vm273 = vcmp.lt.s32.totalorder %v272, 16
        %v274 = vsel %vm273, 1, 0
        %v275 = vcvt.s32.f32 %v274
        %276 = vadd.xlane.f32.xlu0 %v262
        %v277 = vpop.xlane.xlu0 %276
        %278 = vadd.xlane.f32.xlu0 %v263
        %v279 = vpop.xlane.xlu0 %278
        %280 = vadd.xlane.f32.xlu0 %v264
        %v281 = vpop.xlane.xlu0 %280
        %282 = vadd.xlane.f32.xlu0 %v265
        %v283 = vpop.xlane.xlu0 %282
        %284 = vadd.xlane.f32.xlu0 %v266
        %v285 = vpop.xlane.xlu0 %284
        %286 = vadd.xlane.f32.xlu0 %v267
        %v287 = vpop.xlane.xlu0 %286
        %288 = vadd.xlane.f32.xlu0 %v268
        %v289 = vpop.xlane.xlu0 %288
        %290 = vadd.xlane.f32.xlu0 %v269
        %v291 = vpop.xlane.xlu0 %290
        %292 = vadd.xlane.f32.xlu0 %v270
        %v293 = vpop.xlane.xlu0 %292
        %v294 = vmul.f32 %v277, 0.0625
        %v295 = vmul.f32 %v279, 0.0625
        %v296 = vmul.f32 %v281, 0.0625
        %v297 = vmul.f32 %v283, 0.0625
        %v298 = vmul.f32 %v285, 0.0625
        %v299 = vmul.f32 %v287, 0.0625
        %v300 = vmul.f32 %v289, 0.0625
        %v301 = vmul.f32 %v291, 0.0625
        %v302 = vmul.f32 %v293, 0.0625
        %v303 = vsub.f32 %v262, %v294
        %v304 = vsub.f32 %v263, %v295
        %v305 = vsub.f32 %v264, %v296
        %v306 = vsub.f32 %v265, %v297
        %v307 = vsub.f32 %v266, %v298
        %v308 = vsub.f32 %v267, %v299
        %v309 = vsub.f32 %v268, %v300
        %v310 = vsub.f32 %v269, %v301
        %v311 = vsub.f32 %v270, %v302
        %v312 = vmul.f32 %v303, %v303
        %v313 = vmul.f32 %v304, %v304
        %v314 = vmul.f32 %v305, %v305
        %v315 = vmul.f32 %v306, %v306
        %v316 = vmul.f32 %v307, %v307
        %v317 = vmul.f32 %v308, %v308
        %v318 = vmul.f32 %v309, %v309
        %v319 = vmul.f32 %v310, %v310
        %v320 = vmul.f32 %v311, %v311
        %v321 = vmul.f32 %v312, %v275
        %v322 = vmul.f32 %v313, %v275
        %v323 = vmul.f32 %v314, %v275
        %v324 = vmul.f32 %v315, %v275
        %v325 = vmul.f32 %v316, %v275
        %v326 = vmul.f32 %v317, %v275
        %v327 = vmul.f32 %v318, %v275
        %v328 = vmul.f32 %v319, %v275
        %v329 = vmul.f32 %v320, %v275
        %330 = vadd.xlane.f32.xlu0 %v321
        %v331 = vpop.xlane.xlu0 %330
        %332 = vadd.xlane.f32.xlu0 %v322
        %v333 = vpop.xlane.xlu0 %332
        %334 = vadd.xlane.f32.xlu0 %v323
        %v335 = vpop.xlane.xlu0 %334
        %336 = vadd.xlane.f32.xlu0 %v324
        %v337 = vpop.xlane.xlu0 %336
        %338 = vadd.xlane.f32.xlu0 %v325
        %v339 = vpop.xlane.xlu0 %338
        %340 = vadd.xlane.f32.xlu0 %v326
        %v341 = vpop.xlane.xlu0 %340
        %342 = vadd.xlane.f32.xlu0 %v327
        %v343 = vpop.xlane.xlu0 %342
        %344 = vadd.xlane.f32.xlu0 %v328
        %v345 = vpop.xlane.xlu0 %344
        %346 = vadd.xlane.f32.xlu0 %v329
        %v347 = vpop.xlane.xlu0 %346
        %v348 = vmul.f32 %v331, 0.0625
        %v349 = vmul.f32 %v333, 0.0625
        %v350 = vmul.f32 %v335, 0.0625
        %v351 = vmul.f32 %v337, 0.0625
        %v352 = vmul.f32 %v339, 0.0625
        %v353 = vmul.f32 %v341, 0.0625
        %v354 = vmul.f32 %v343, 0.0625
        %v355 = vmul.f32 %v345, 0.0625
        %v356 = vmul.f32 %v347, 0.0625
        %v357 = vadd.f32 %v348, 1e-05
        %v358 = vadd.f32 %v349, 1e-05
        %v359 = vadd.f32 %v350, 1e-05
        %v360 = vadd.f32 %v351, 1e-05
        %v361 = vadd.f32 %v352, 1e-05
        %v362 = vadd.f32 %v353, 1e-05
        %v363 = vadd.f32 %v354, 1e-05
        %v364 = vadd.f32 %v355, 1e-05
        %v365 = vadd.f32 %v356, 1e-05
        %v366 = vrsqrt.pop %v357
        %v367 = vrsqrt.pop %v358
        %v368 = vrsqrt.pop %v359
        %v369 = vrsqrt.pop %v360
        %v370 = vrsqrt.pop %v361
        %v371 = vrsqrt.pop %v362
        %v372 = vrsqrt.pop %v363
        %v373 = vrsqrt.pop %v364
        %v374 = vrsqrt.pop %v365
        %v375 = vmul.f32 %v303, %v366
        %v376 = vmul.f32 %v304, %v367
        %v377 = vmul.f32 %v305, %v368
        %v378 = vmul.f32 %v306, %v369
        %v379 = vmul.f32 %v307, %v370
        %v380 = vmul.f32 %v308, %v371
        %v381 = vmul.f32 %v309, %v372
        %v382 = vmul.f32 %v310, %v373
        %v383 = vmul.f32 %v311, %v374
        %v384 = vld [vmem:[#allocation2] sm:$0xf]
        %v385 = vld [vmem:[#allocation2 + $0x4] sm:$0xf]
        %v386 = vld [vmem:[#allocation2 + $0x8] sm:$0xf]
        %v387 = vld [vmem:[#allocation2 + $0xc] sm:$0xf]
        %v388 = vld [vmem:[#allocation2 + $0x10] sm:$0xf]
        %v389 = vld [vmem:[#allocation2 + $0x14] sm:$0xf]
        %v390 = vld [vmem:[#allocation2 + $0x18] sm:$0xf]
        %v391 = vld [vmem:[#allocation2 + $0x1c] sm:$0xf]
        %v392 = vld [vmem:[#allocation2 + $0x20] sm:$0xf]
        %v393 = vld [vmem:[#allocation2 + $0x24] sm:$0xf]
        %v394 = vld [vmem:[#allocation2 + $0x28] sm:$0xf]
        %v395 = vld [vmem:[#allocation2 + $0x2c] sm:$0xf]
        %v396 = vld [vmem:[#allocation2 + $0x30] sm:$0xf]
        %v397 = vld [vmem:[#allocation2 + $0x34] sm:$0xf]
        %v398 = vld [vmem:[#allocation2 + $0x38] sm:$0xf]
        %v399 = vld [vmem:[#allocation2 + $0x3c] sm:$0xf]
        %v400 = vpack.c.bf16 %v376, %v375
        %v401 = vpack.c.bf16 %v378, %v377
        %v402 = vpack.c.bf16 %v380, %v379
        %v403 = vpack.c.bf16 %v382, %v381
        %v404 = vpack.c.bf16 %v383, %v383
        %v405 = vld [vmem:[%s2] sm:$0x1]
        %v406 = vlaneseq
        %v407 = vshrl.u32 %v406, 7
        %v408 = vsub.s32 0, %v407
        %v409 = vrot.slane %v405, %v408
        %v426 = vunpack.c.l.b16 %v384
        %v427 = vunpack.c.l.b16 %v385
        %v428 = vunpack.c.l.b16 %v386
        %v429 = vunpack.c.l.b16 %v387
        %v430 = vunpack.c.l.b16 %v388
        %v431 = vunpack.c.l.b16 %v389
        %v432 = vunpack.c.l.b16 %v390
        %v433 = vunpack.c.l.b16 %v391
        %v434 = vunpack.c.l.b16 %v392
        %v435 = vunpack.c.l.b16 %v393
        %v436 = vunpack.c.l.b16 %v394
        %v437 = vunpack.c.l.b16 %v395
        %v438 = vunpack.c.l.b16 %v396
        %v439 = vunpack.c.l.b16 %v397
        %v440 = vunpack.c.l.b16 %v398
        %v441 = vunpack.c.l.b16 %v399
        %v442 = vpack.c.b16 %v427, %v426
        %v443 = vpack.c.b16 %v429, %v428
        %v444 = vpack.c.b16 %v431, %v430
        %v445 = vpack.c.b16 %v433, %v432
        %v446 = vpack.c.b16 %v435, %v434
        %v447 = vpack.c.b16 %v437, %v436
        %v448 = vpack.c.b16 %v439, %v438
        %v449 = vpack.c.b16 %v441, %v440
        %458 = vmatprep.subr.bf16.mxu0 0
        %459 = vmatpush1.bf16.msra.mxu0 %v449
        %460 = vmatprep.subr.bf16.mxu0 0
        %461 = vmatpush1.bf16.msra.mxu0 %v448
        %462 = vmatprep.subr.bf16.mxu0 0
        %463 = vmatpush1.bf16.msra.mxu0 %v447
        %464 = vmatprep.subr.bf16.mxu0 0
        %465 = vmatpush1.bf16.msra.mxu0 %v446
        %466 = vmatprep.subr.bf16.mxu0 0
        %467 = vmatpush1.bf16.msra.mxu0 %v445
        %468 = vmatprep.subr.bf16.mxu0 0
        %469 = vmatpush1.bf16.msra.mxu0 %v444
        %470 = vmatprep.subr.bf16.mxu0 0
        %471 = vmatpush1.bf16.msra.mxu0 %v443
        %472 = vmatprep.subr.bf16.mxu0 0
        %473 = vmatpush1.bf16.msra.mxu0 %v442
        %474 = vmatprep.subr.bf16.mxu0 0
        %475 = vmatpush2.bf16.msra.mxu0 0
        %476 = vmatprep.subr.bf16.mxu0 0
        %477 = vmatpush2.bf16.msra.mxu0 0
        %478 = vmatprep.subr.bf16.mxu0 0
        %479 = vmatpush2.bf16.msra.mxu0 0
        %480 = vmatprep.subr.bf16.mxu0 0
        %481 = vmatpush2.bf16.msra.mxu0 0
        %482 = vmatprep.subr.bf16.mxu0 0
        %483 = vmatpush2.bf16.msra.mxu0 0
        %484 = vmatprep.subr.bf16.mxu0 0
        %485 = vmatpush2.bf16.msra.mxu0 0
        %486 = vmatprep.subr.bf16.mxu0 0
        %487 = vmatpush2.bf16.msra.mxu0 0
        %488 = vmatprep.subr.bf16.mxu0 0
        %489 = vmatpush2.bf16.msra.mxu0 0
        %490 = vmatprep.mubr.bf16.mxu0 0
        %491 = vmatmul.mubr.bf16.gmra.mxu0 %v400
        %v492 = vpop.f32.mrf.mxu0
        %v493 = vadd.f32 %v409, %v492
        %v494 = vpop.f32.mrf.mxu0
        %v495 = vpop.f32.mrf.mxu0
        %v496 = vadd.f32 %v409, %v495
        %v497 = vpop.f32.mrf.mxu0
        %498 = vmatprep.mubr.bf16.mxu0 0
        %499 = vmatmul.mubr.bf16.gmra.mxu0 %v401
        %v500 = vpop.f32.mrf.mxu0
        %v501 = vadd.f32 %v409, %v500
        %v502 = vpop.f32.mrf.mxu0
        %v503 = vpop.f32.mrf.mxu0
        %v504 = vadd.f32 %v409, %v503
        %v505 = vpop.f32.mrf.mxu0
        %506 = vmatprep.mubr.bf16.mxu0 0
        %507 = vmatmul.mubr.bf16.gmra.mxu0 %v402
        %v508 = vpop.f32.mrf.mxu0
        %v509 = vadd.f32 %v409, %v508
        %v510 = vpop.f32.mrf.mxu0
        %v511 = vpop.f32.mrf.mxu0
        %v512 = vadd.f32 %v409, %v511
        %v513 = vpop.f32.mrf.mxu0
        %514 = vmatprep.mubr.bf16.mxu0 0
        %515 = vmatmul.mubr.bf16.gmra.mxu0 %v403
        %v516 = vpop.f32.mrf.mxu0
        %v517 = vadd.f32 %v409, %v516
        %v518 = vpop.f32.mrf.mxu0
        %v519 = vpop.f32.mrf.mxu0
        %v520 = vadd.f32 %v409, %v519
        %v521 = vpop.f32.mrf.mxu0
        %522 = vmatprep.mubr.bf16.mxu0 0
        %523 = vmatmul.mubr.bf16.gmra.mxu0 %v404
        %v524 = vpop.f32.mrf.mxu0
        %v525 = vadd.f32 %v409, %v524
        %v526 = vpop.f32.mrf.mxu0
        %v527 = vpop.f32.mrf.mxu0
        %v528 = vpop.f32.mrf.mxu0
        %529 = vdwg.mxu0
        %s530 = scalar_lea.vmem [#allocation2], 64
        %v531 = vld [vmem:[%s530] sm:$0xf]
        %v532 = vld [vmem:[%s530 + $0x4] sm:$0xf]
        %v533 = vld [vmem:[%s530 + $0x8] sm:$0xf]
        %v534 = vld [vmem:[%s530 + $0xc] sm:$0xf]
        %v535 = vld [vmem:[%s530 + $0x10] sm:$0xf]
        %v536 = vld [vmem:[%s530 + $0x14] sm:$0xf]
        %v537 = vld [vmem:[%s530 + $0x18] sm:$0xf]
        %v538 = vld [vmem:[%s530 + $0x1c] sm:$0xf]
        %v539 = vld [vmem:[%s530 + $0x20] sm:$0xf]
        %v540 = vld [vmem:[%s530 + $0x24] sm:$0xf]
        %v541 = vld [vmem:[%s530 + $0x28] sm:$0xf]
        %v542 = vld [vmem:[%s530 + $0x2c] sm:$0xf]
        %v543 = vld [vmem:[%s530 + $0x30] sm:$0xf]
        %v544 = vld [vmem:[%s530 + $0x34] sm:$0xf]
        %v545 = vld [vmem:[%s530 + $0x38] sm:$0xf]
        %v546 = vld [vmem:[%s530 + $0x3c] sm:$0xf]
        %v547 = vpack.c.bf16 %v496, %v493
        %v548 = vpack.c.bf16 %v504, %v501
        %v549 = vpack.c.bf16 %v512, %v509
        %v550 = vpack.c.bf16 %v520, %v517
        %v551 = vpack.c.bf16 %v525, %v525
        %v552 = vld [vmem:[%s2 + $0x1] sm:$0x1]
        %v553 = vlaneseq
        %v554 = vshrl.u32 %v553, 7
        %v555 = vsub.s32 0, %v554
        %v556 = vrot.slane %v552, %v555
        %v573 = vunpack.c.l.b16 %v531
        %v574 = vunpack.c.l.b16 %v532
        %v575 = vunpack.c.l.b16 %v533
        %v576 = vunpack.c.l.b16 %v534
        %v577 = vunpack.c.l.b16 %v535
        %v578 = vunpack.c.l.b16 %v536
        %v579 = vunpack.c.l.b16 %v537
        %v580 = vunpack.c.l.b16 %v538
        %v581 = vunpack.c.l.b16 %v539
        %v582 = vunpack.c.l.b16 %v540
        %v583 = vunpack.c.l.b16 %v541
        %v584 = vunpack.c.l.b16 %v542
        %v585 = vunpack.c.l.b16 %v543
        %v586 = vunpack.c.l.b16 %v544
        %v587 = vunpack.c.l.b16 %v545
        %v588 = vunpack.c.l.b16 %v546
        %v589 = vpack.c.b16 %v574, %v573
        %v590 = vpack.c.b16 %v576, %v575
        %v591 = vpack.c.b16 %v578, %v577
        %v592 = vpack.c.b16 %v580, %v579
        %v593 = vpack.c.b16 %v582, %v581
        %v594 = vpack.c.b16 %v584, %v583
        %v595 = vpack.c.b16 %v586, %v585
        %v596 = vpack.c.b16 %v588, %v587
        %605 = vmatprep.subr.bf16.mxu0 0
        %606 = vmatpush1.bf16.msra.mxu0 %v596
        %607 = vmatprep.subr.bf16.mxu0 0
        %608 = vmatpush1.bf16.msra.mxu0 %v595
        %609 = vmatprep.subr.bf16.mxu0 0
        %610 = vmatpush1.bf16.msra.mxu0 %v594
        %611 = vmatprep.subr.bf16.mxu0 0
        %612 = vmatpush1.bf16.msra.mxu0 %v593
        %613 = vmatprep.subr.bf16.mxu0 0
        %614 = vmatpush1.bf16.msra.mxu0 %v592
        %615 = vmatprep.subr.bf16.mxu0 0
        %616 = vmatpush1.bf16.msra.mxu0 %v591
        %617 = vmatprep.subr.bf16.mxu0 0
        %618 = vmatpush1.bf16.msra.mxu0 %v590
        %619 = vmatprep.subr.bf16.mxu0 0
        %620 = vmatpush1.bf16.msra.mxu0 %v589
        %621 = vmatprep.subr.bf16.mxu0 0
        %622 = vmatpush2.bf16.msra.mxu0 0
        %623 = vmatprep.subr.bf16.mxu0 0
        %624 = vmatpush2.bf16.msra.mxu0 0
        %625 = vmatprep.subr.bf16.mxu0 0
        %626 = vmatpush2.bf16.msra.mxu0 0
        %627 = vmatprep.subr.bf16.mxu0 0
        %628 = vmatpush2.bf16.msra.mxu0 0
        %629 = vmatprep.subr.bf16.mxu0 0
        %630 = vmatpush2.bf16.msra.mxu0 0
        %631 = vmatprep.subr.bf16.mxu0 0
        %632 = vmatpush2.bf16.msra.mxu0 0
        %633 = vmatprep.subr.bf16.mxu0 0
        %634 = vmatpush2.bf16.msra.mxu0 0
        %635 = vmatprep.subr.bf16.mxu0 0
        %636 = vmatpush2.bf16.msra.mxu0 0
        %637 = vmatprep.mubr.bf16.mxu0 0
        %638 = vmatmul.mubr.bf16.gmra.mxu0 %v547
        %v639 = vpop.f32.mrf.mxu0
        %v640 = vadd.f32 %v556, %v639
        %v641 = vpop.f32.mrf.mxu0
        %v642 = vpop.f32.mrf.mxu0
        %v643 = vadd.f32 %v556, %v642
        %v644 = vpop.f32.mrf.mxu0
        %645 = vmatprep.mubr.bf16.mxu0 0
        %646 = vmatmul.mubr.bf16.gmra.mxu0 %v548
        %v647 = vpop.f32.mrf.mxu0
        %v648 = vadd.f32 %v556, %v647
        %v649 = vpop.f32.mrf.mxu0
        %v650 = vpop.f32.mrf.mxu0
        %v651 = vadd.f32 %v556, %v650
        %v652 = vpop.f32.mrf.mxu0
        %653 = vmatprep.mubr.bf16.mxu0 0
        %654 = vmatmul.mubr.bf16.gmra.mxu0 %v549
        %v655 = vpop.f32.mrf.mxu0
        %v656 = vadd.f32 %v556, %v655
        %v657 = vpop.f32.mrf.mxu0
        %v658 = vpop.f32.mrf.mxu0
        %v659 = vadd.f32 %v556, %v658
        %v660 = vpop.f32.mrf.mxu0
        %661 = vmatprep.mubr.bf16.mxu0 0
        %662 = vmatmul.mubr.bf16.gmra.mxu0 %v550
        %v663 = vpop.f32.mrf.mxu0
        %v664 = vadd.f32 %v556, %v663
        %v665 = vpop.f32.mrf.mxu0
        %v666 = vpop.f32.mrf.mxu0
        %v667 = vadd.f32 %v556, %v666
        %v668 = vpop.f32.mrf.mxu0
        %669 = vmatprep.mubr.bf16.mxu0 0
        %670 = vmatmul.mubr.bf16.gmra.mxu0 %v551
        %v671 = vpop.f32.mrf.mxu0
        %v672 = vadd.f32 %v556, %v671
        %v673 = vpop.f32.mrf.mxu0
        %v674 = vpop.f32.mrf.mxu0
        %v675 = vpop.f32.mrf.mxu0
        %676 = vdwg.mxu0
        %s677 = sld [smem:[#allocation6]]
        %vm678 = vcmp.gt.f32.partialorder %v640, 0.0
        %vm679 = vcmp.gt.f32.partialorder %v643, 0.0
        %vm680 = vcmp.gt.f32.partialorder %v648, 0.0
        %vm681 = vcmp.gt.f32.partialorder %v651, 0.0
        %vm682 = vcmp.gt.f32.partialorder %v656, 0.0
        %vm683 = vcmp.gt.f32.partialorder %v659, 0.0
        %vm684 = vcmp.gt.f32.partialorder %v664, 0.0
        %vm685 = vcmp.gt.f32.partialorder %v667, 0.0
        %vm686 = vcmp.gt.f32.partialorder %v672, 0.0
        %v687 = vstv %s677
        %v688 = vmul.f32 %v687, %v640
        %v689 = vmul.f32 %v687, %v643
        %v690 = vmul.f32 %v687, %v648
        %v691 = vmul.f32 %v687, %v651
        %v692 = vmul.f32 %v687, %v656
        %v693 = vmul.f32 %v687, %v659
        %v694 = vmul.f32 %v687, %v664
        %v695 = vmul.f32 %v687, %v667
        %v696 = vmul.f32 %v687, %v672
        %v697 = vsel %vm678, %v640, %v688
        %v698 = vsel %vm679, %v643, %v689
        %v699 = vsel %vm680, %v648, %v690
        %v700 = vsel %vm681, %v651, %v691
        %v701 = vsel %vm682, %v656, %v692
        %v702 = vsel %vm683, %v659, %v693
        %v703 = vsel %vm684, %v664, %v694
        %v704 = vsel %vm685, %v667, %v695
        %v705 = vsel %vm686, %v672, %v696
        %s706 = scalar_lea.vmem [#allocation2], 128
        %v707 = vld [vmem:[%s706] sm:$0xf]
        %v708 = vld [vmem:[%s706 + $0x4] sm:$0xf]
        %v709 = vld [vmem:[%s706 + $0x8] sm:$0xf]
        %v710 = vld [vmem:[%s706 + $0xc] sm:$0xf]
        %v711 = vld [vmem:[%s706 + $0x10] sm:$0xf]
        %v712 = vld [vmem:[%s706 + $0x14] sm:$0xf]
        %v713 = vld [vmem:[%s706 + $0x18] sm:$0xf]
        %v714 = vld [vmem:[%s706 + $0x1c] sm:$0xf]
        %v715 = vld [vmem:[%s706 + $0x20] sm:$0xf]
        %v716 = vld [vmem:[%s706 + $0x24] sm:$0xf]
        %v717 = vld [vmem:[%s706 + $0x28] sm:$0xf]
        %v718 = vld [vmem:[%s706 + $0x2c] sm:$0xf]
        %v719 = vld [vmem:[%s706 + $0x30] sm:$0xf]
        %v720 = vld [vmem:[%s706 + $0x34] sm:$0xf]
        %v721 = vld [vmem:[%s706 + $0x38] sm:$0xf]
        %v722 = vld [vmem:[%s706 + $0x3c] sm:$0xf]
        %v723 = vpack.c.bf16 %v698, %v697
        %v724 = vpack.c.bf16 %v700, %v699
        %v725 = vpack.c.bf16 %v702, %v701
        %v726 = vpack.c.bf16 %v704, %v703
        %v727 = vpack.c.bf16 %v705, %v705
        %v728 = vld [vmem:[%s2 + $0x2] sm:$0x1]
        %v729 = vlaneseq
        %v730 = vshrl.u32 %v729, 7
        %v731 = vsub.s32 0, %v730
        %v732 = vrot.slane %v728, %v731
        %v749 = vunpack.c.l.b16 %v707
        %v750 = vunpack.c.l.b16 %v708
        %v751 = vunpack.c.l.b16 %v709
        %v752 = vunpack.c.l.b16 %v710
        %v753 = vunpack.c.l.b16 %v711
        %v754 = vunpack.c.l.b16 %v712
        %v755 = vunpack.c.l.b16 %v713
        %v756 = vunpack.c.l.b16 %v714
        %v757 = vunpack.c.l.b16 %v715
        %v758 = vunpack.c.l.b16 %v716
        %v759 = vunpack.c.l.b16 %v717
        %v760 = vunpack.c.l.b16 %v718
        %v761 = vunpack.c.l.b16 %v719
        %v762 = vunpack.c.l.b16 %v720
        %v763 = vunpack.c.l.b16 %v721
        %v764 = vunpack.c.l.b16 %v722
        %v765 = vpack.c.b16 %v750, %v749
        %v766 = vpack.c.b16 %v752, %v751
        %v767 = vpack.c.b16 %v754, %v753
        %v768 = vpack.c.b16 %v756, %v755
        %v769 = vpack.c.b16 %v758, %v757
        %v770 = vpack.c.b16 %v760, %v759
        %v771 = vpack.c.b16 %v762, %v761
        %v772 = vpack.c.b16 %v764, %v763
        %781 = vmatprep.subr.bf16.mxu0 0
        %782 = vmatpush1.bf16.msra.mxu0 %v772
        %783 = vmatprep.subr.bf16.mxu0 0
        %784 = vmatpush1.bf16.msra.mxu0 %v771
        %785 = vmatprep.subr.bf16.mxu0 0
        %786 = vmatpush1.bf16.msra.mxu0 %v770
        %787 = vmatprep.subr.bf16.mxu0 0
        %788 = vmatpush1.bf16.msra.mxu0 %v769
        %789 = vmatprep.subr.bf16.mxu0 0
        %790 = vmatpush1.bf16.msra.mxu0 %v768
        %791 = vmatprep.subr.bf16.mxu0 0
        %792 = vmatpush1.bf16.msra.mxu0 %v767
        %793 = vmatprep.subr.bf16.mxu0 0
        %794 = vmatpush1.bf16.msra.mxu0 %v766
        %795 = vmatprep.subr.bf16.mxu0 0
        %796 = vmatpush1.bf16.msra.mxu0 %v765
        %797 = vmatprep.subr.bf16.mxu0 0
        %798 = vmatpush2.bf16.msra.mxu0 0
        %799 = vmatprep.subr.bf16.mxu0 0
        %800 = vmatpush2.bf16.msra.mxu0 0
        %801 = vmatprep.subr.bf16.mxu0 0
        %802 = vmatpush2.bf16.msra.mxu0 0
        %803 = vmatprep.subr.bf16.mxu0 0
        %804 = vmatpush2.bf16.msra.mxu0 0
        %805 = vmatprep.subr.bf16.mxu0 0
        %806 = vmatpush2.bf16.msra.mxu0 0
        %807 = vmatprep.subr.bf16.mxu0 0
        %808 = vmatpush2.bf16.msra.mxu0 0
        %809 = vmatprep.subr.bf16.mxu0 0
        %810 = vmatpush2.bf16.msra.mxu0 0
        %811 = vmatprep.subr.bf16.mxu0 0
        %812 = vmatpush2.bf16.msra.mxu0 0
        %813 = vmatprep.mubr.bf16.mxu0 0
        %814 = vmatmul.mubr.bf16.gmra.mxu0 %v723
        %v815 = vpop.f32.mrf.mxu0
        %v816 = vadd.f32 %v732, %v815
        %v817 = vpop.f32.mrf.mxu0
        %v818 = vpop.f32.mrf.mxu0
        %v819 = vadd.f32 %v732, %v818
        %v820 = vpop.f32.mrf.mxu0
        %821 = vmatprep.mubr.bf16.mxu0 0
        %822 = vmatmul.mubr.bf16.gmra.mxu0 %v724
        %v823 = vpop.f32.mrf.mxu0
        %v824 = vadd.f32 %v732, %v823
        %v825 = vpop.f32.mrf.mxu0
        %v826 = vpop.f32.mrf.mxu0
        %v827 = vadd.f32 %v732, %v826
        %v828 = vpop.f32.mrf.mxu0
        %829 = vmatprep.mubr.bf16.mxu0 0
        %830 = vmatmul.mubr.bf16.gmra.mxu0 %v725
        %v831 = vpop.f32.mrf.mxu0
        %v832 = vadd.f32 %v732, %v831
        %v833 = vpop.f32.mrf.mxu0
        %v834 = vpop.f32.mrf.mxu0
        %v835 = vadd.f32 %v732, %v834
        %v836 = vpop.f32.mrf.mxu0
        %837 = vmatprep.mubr.bf16.mxu0 0
        %838 = vmatmul.mubr.bf16.gmra.mxu0 %v726
        %v839 = vpop.f32.mrf.mxu0
        %v840 = vadd.f32 %v732, %v839
        %v841 = vpop.f32.mrf.mxu0
        %v842 = vpop.f32.mrf.mxu0
        %v843 = vadd.f32 %v732, %v842
        %v844 = vpop.f32.mrf.mxu0
        %845 = vmatprep.mubr.bf16.mxu0 0
        %846 = vmatmul.mubr.bf16.gmra.mxu0 %v727
        %v847 = vpop.f32.mrf.mxu0
        %v848 = vadd.f32 %v732, %v847
        %v849 = vpop.f32.mrf.mxu0
        %v850 = vpop.f32.mrf.mxu0
        %v851 = vpop.f32.mrf.mxu0
        %852 = vdwg.mxu0
        %v853 = vadd.f32 %v816, %v493
        %v854 = vadd.f32 %v819, %v496
        %v855 = vadd.f32 %v824, %v501
        %v856 = vadd.f32 %v827, %v504
        %v857 = vadd.f32 %v832, %v509
        %v858 = vadd.f32 %v835, %v512
        %v859 = vadd.f32 %v840, %v517
        %v860 = vadd.f32 %v843, %v520
        %v861 = vadd.f32 %v848, %v525
        %s862 = sld [smem:[#allocation6 + $0x1]]
        %vm863 = vcmp.gt.f32.partialorder %v853, 0.0
        %vm864 = vcmp.gt.f32.partialorder %v854, 0.0
        %vm865 = vcmp.gt.f32.partialorder %v855, 0.0
        %vm866 = vcmp.gt.f32.partialorder %v856, 0.0
        %vm867 = vcmp.gt.f32.partialorder %v857, 0.0
        %vm868 = vcmp.gt.f32.partialorder %v858, 0.0
        %vm869 = vcmp.gt.f32.partialorder %v859, 0.0
        %vm870 = vcmp.gt.f32.partialorder %v860, 0.0
        %vm871 = vcmp.gt.f32.partialorder %v861, 0.0
        %v872 = vstv %s862
        %v873 = vmul.f32 %v872, %v853
        %v874 = vmul.f32 %v872, %v854
        %v875 = vmul.f32 %v872, %v855
        %v876 = vmul.f32 %v872, %v856
        %v877 = vmul.f32 %v872, %v857
        %v878 = vmul.f32 %v872, %v858
        %v879 = vmul.f32 %v872, %v859
        %v880 = vmul.f32 %v872, %v860
        %v881 = vmul.f32 %v872, %v861
        %v882 = vsel %vm863, %v853, %v873
        %v883 = vsel %vm864, %v854, %v874
        %v884 = vsel %vm865, %v855, %v875
        %v885 = vsel %vm866, %v856, %v876
        %v886 = vsel %vm867, %v857, %v877
        %v887 = vsel %vm868, %v858, %v878
        %v888 = vsel %vm869, %v859, %v879
        %v889 = vsel %vm870, %v860, %v880
        %v890 = vsel %vm871, %v861, %v881
        %v891 = vlaneseq
        %v892 = vshrl.u32 %v891, 7
        %v893 = vadd.s32 %v892, 8
        %v894 = vadd.s32 %v892, 16
        %v895 = vmul.u32 %v892, 3
        %v896 = vmul.u32 %v893, 3
        %v897 = vmul.u32 %v894, 3
        %vm898 = vcmp.eq.s32.totalorder %v272, %v895
        %vm899 = vcmp.eq.s32.totalorder %v272, %v896
        %vm900 = vcmp.eq.s32.totalorder %v272, %v897
        %v901 = vsel %vm898, 1, 0
        %v902 = vsel %vm899, 1, 0
        %v903 = vsel %vm900, 1, 0
        %v904 = vcvt.s32.f32 %v901
        %v905 = vcvt.s32.f32 %v902
        %v906 = vcvt.s32.f32 %v903
        %vm907 = vcmask 588800
        %v909 = vsel %vm907, %v904, 0
        %v912 = vsel %vm907, %v905, 0
        %v915 = vsel %vm907, %v906, 0
        %917 = vmatprep.subr.mxu0 0.0
        %918 = vmatpush1.msra.mxu0 0.0
        %919 = vmatprep.subr.mxu0 0.0
        %920 = vmatpush1.msra.mxu0 0.0
        %921 = vmatprep.subr.mxu0 0.0
        %922 = vmatpush1.msra.mxu0 0.0
        %923 = vmatprep.subr.mxu0 0.0
        %924 = vmatpush1.msra.mxu0 0.0
        %925 = vmatprep.subr.mxu0 0.0
        %926 = vmatpush1.msra.mxu0 0.0
        %927 = vmatprep.subr.mxu0 0.0
        %928 = vmatpush1.msra.mxu0 0.0
        %929 = vmatprep.subr.mxu0 0.0
        %930 = vmatpush1.msra.mxu0 0.0
        %931 = vmatprep.subr.mxu0 0.0
        %932 = vmatpush1.msra.mxu0 %v890
        %933 = vmatprep.subr.mxu0 0.0
        %934 = vmatpush1.msra.mxu0 %v889
        %935 = vmatprep.subr.mxu0 0.0
        %936 = vmatpush1.msra.mxu0 %v888
        %937 = vmatprep.subr.mxu0 0.0
        %938 = vmatpush1.msra.mxu0 %v887
        %939 = vmatprep.subr.mxu0 0.0
        %940 = vmatpush1.msra.mxu0 %v886
        %941 = vmatprep.subr.mxu0 0.0
        %942 = vmatpush1.msra.mxu0 %v885
        %943 = vmatprep.subr.mxu0 0.0
        %944 = vmatpush1.msra.mxu0 %v884
        %945 = vmatprep.subr.mxu0 0.0
        %946 = vmatpush1.msra.mxu0 %v883
        %947 = vmatprep.subr.mxu0 0.0
        %948 = vmatpush1.msra.mxu0 %v882
        %949 = vmatprep.subr.mxu0 0.0
        %950 = vmatpush2.msra.mxu0 0.0
        %951 = vmatprep.subr.mxu0 0.0
        %952 = vmatpush2.msra.mxu0 0.0
        %953 = vmatprep.subr.mxu0 0.0
        %954 = vmatpush2.msra.mxu0 0.0
        %955 = vmatprep.subr.mxu0 0.0
        %956 = vmatpush2.msra.mxu0 0.0
        %957 = vmatprep.subr.mxu0 0.0
        %958 = vmatpush2.msra.mxu0 0.0
        %959 = vmatprep.subr.mxu0 0.0
        %960 = vmatpush2.msra.mxu0 0.0
        %961 = vmatprep.subr.mxu0 0.0
        %962 = vmatpush2.msra.mxu0 0.0
        %963 = vmatprep.subr.mxu0 0.0
        %964 = vmatpush2.msra.mxu0 0.0
        %965 = vmatprep.subr.mxu0 0.0
        %966 = vmatpush2.msra.mxu0 0.0
        %967 = vmatprep.subr.mxu0 0.0
        %968 = vmatpush2.msra.mxu0 0.0
        %969 = vmatprep.subr.mxu0 0.0
        %970 = vmatpush2.msra.mxu0 0.0
        %971 = vmatprep.subr.mxu0 0.0
        %972 = vmatpush2.msra.mxu0 0.0
        %973 = vmatprep.subr.mxu0 0.0
        %974 = vmatpush2.msra.mxu0 0.0
        %975 = vmatprep.subr.mxu0 0.0
        %976 = vmatpush2.msra.mxu0 0.0
        %977 = vmatprep.subr.mxu0 0.0
        %978 = vmatpush2.msra.mxu0 0.0
        %979 = vmatprep.subr.mxu0 0.0
        %980 = vmatpush2.msra.mxu0 0.0
        %981 = vmatprep.mubr.f32.mxu0 0.0
        %982 = vmatmul.mubr.f32.gmra.mxu0 %v909
        %v983 = vpop.f32.mrf.mxu0
        %v984 = vadd.f32 0.0, %v983
        %v985 = vpop.f32.mrf.mxu0
        %986 = vmatprep.mubr.f32.mxu0 0.0
        %987 = vmatmul.mubr.f32.gmra.mxu0 %v912
        %v988 = vpop.f32.mrf.mxu0
        %v989 = vadd.f32 0.0, %v988
        %v990 = vpop.f32.mrf.mxu0
        %991 = vmatprep.mubr.f32.mxu0 0.0
        %992 = vmatmul.mubr.f32.gmra.mxu0 %v915
        %v993 = vpop.f32.mrf.mxu0
        %v994 = vadd.f32 0.0, %v993
        %v995 = vpop.f32.mrf.mxu0
        %996 = vdwg.mxu0
        %v997 = vadd.s32 %v895, 1
        %v998 = vadd.s32 %v896, 1
        %v999 = vadd.s32 %v897, 1
        %vm1000 = vcmp.eq.s32.totalorder %v272, %v997
        %vm1001 = vcmp.eq.s32.totalorder %v272, %v998
        %vm1002 = vcmp.eq.s32.totalorder %v272, %v999
        %v1003 = vsel %vm1000, 1, 0
        %v1004 = vsel %vm1001, 1, 0
        %v1005 = vsel %vm1002, 1, 0
        %v1006 = vcvt.s32.f32 %v1003
        %v1007 = vcvt.s32.f32 %v1004
        %v1008 = vcvt.s32.f32 %v1005
        %v1010 = vsel %vm907, %v1006, 0
        %v1013 = vsel %vm907, %v1007, 0
        %v1016 = vsel %vm907, %v1008, 0
        %1018 = vmatprep.subr.mxu0 0.0
        %1019 = vmatpush1.msra.mxu0 0.0
        %1020 = vmatprep.subr.mxu0 0.0
        %1021 = vmatpush1.msra.mxu0 0.0
        %1022 = vmatprep.subr.mxu0 0.0
        %1023 = vmatpush1.msra.mxu0 0.0
        %1024 = vmatprep.subr.mxu0 0.0
        %1025 = vmatpush1.msra.mxu0 0.0
        %1026 = vmatprep.subr.mxu0 0.0
        %1027 = vmatpush1.msra.mxu0 0.0
        %1028 = vmatprep.subr.mxu0 0.0
        %1029 = vmatpush1.msra.mxu0 0.0
        %1030 = vmatprep.subr.mxu0 0.0
        %1031 = vmatpush1.msra.mxu0 0.0
        %1032 = vmatprep.subr.mxu0 0.0
        %1033 = vmatpush1.msra.mxu0 %v890
        %1034 = vmatprep.subr.mxu0 0.0
        %1035 = vmatpush1.msra.mxu0 %v889
        %1036 = vmatprep.subr.mxu0 0.0
        %1037 = vmatpush1.msra.mxu0 %v888
        %1038 = vmatprep.subr.mxu0 0.0
        %1039 = vmatpush1.msra.mxu0 %v887
        %1040 = vmatprep.subr.mxu0 0.0
        %1041 = vmatpush1.msra.mxu0 %v886
        %1042 = vmatprep.subr.mxu0 0.0
        %1043 = vmatpush1.msra.mxu0 %v885
        %1044 = vmatprep.subr.mxu0 0.0
        %1045 = vmatpush1.msra.mxu0 %v884
        %1046 = vmatprep.subr.mxu0 0.0
        %1047 = vmatpush1.msra.mxu0 %v883
        %1048 = vmatprep.subr.mxu0 0.0
        %1049 = vmatpush1.msra.mxu0 %v882
        %1050 = vmatprep.subr.mxu0 0.0
        %1051 = vmatpush2.msra.mxu0 0.0
        %1052 = vmatprep.subr.mxu0 0.0
        %1053 = vmatpush2.msra.mxu0 0.0
        %1054 = vmatprep.subr.mxu0 0.0
        %1055 = vmatpush2.msra.mxu0 0.0
        %1056 = vmatprep.subr.mxu0 0.0
        %1057 = vmatpush2.msra.mxu0 0.0
        %1058 = vmatprep.subr.mxu0 0.0
        %1059 = vmatpush2.msra.mxu0 0.0
        %1060 = vmatprep.subr.mxu0 0.0
        %1061 = vmatpush2.msra.mxu0 0.0
        %1062 = vmatprep.subr.mxu0 0.0
        %1063 = vmatpush2.msra.mxu0 0.0
        %1064 = vmatprep.subr.mxu0 0.0
        %1065 = vmatpush2.msra.mxu0 0.0
        %1066 = vmatprep.subr.mxu0 0.0
        %1067 = vmatpush2.msra.mxu0 0.0
        %1068 = vmatprep.subr.mxu0 0.0
        %1069 = vmatpush2.msra.mxu0 0.0
        %1070 = vmatprep.subr.mxu0 0.0
        %1071 = vmatpush2.msra.mxu0 0.0
        %1072 = vmatprep.subr.mxu0 0.0
        %1073 = vmatpush2.msra.mxu0 0.0
        %1074 = vmatprep.subr.mxu0 0.0
        %1075 = vmatpush2.msra.mxu0 0.0
        %1076 = vmatprep.subr.mxu0 0.0
        %1077 = vmatpush2.msra.mxu0 0.0
        %1078 = vmatprep.subr.mxu0 0.0
        %1079 = vmatpush2.msra.mxu0 0.0
        %1080 = vmatprep.subr.mxu0 0.0
        %1081 = vmatpush2.msra.mxu0 0.0
        %1082 = vmatprep.mubr.f32.mxu0 0.0
        %1083 = vmatmul.mubr.f32.gmra.mxu0 %v1010
        %v1084 = vpop.f32.mrf.mxu0
        %v1085 = vadd.f32 0.0, %v1084
        %v1086 = vpop.f32.mrf.mxu0
        %1087 = vmatprep.mubr.f32.mxu0 0.0
        %1088 = vmatmul.mubr.f32.gmra.mxu0 %v1013
        %v1089 = vpop.f32.mrf.mxu0
        %v1090 = vadd.f32 0.0, %v1089
        %v1091 = vpop.f32.mrf.mxu0
        %1092 = vmatprep.mubr.f32.mxu0 0.0
        %1093 = vmatmul.mubr.f32.gmra.mxu0 %v1016
        %v1094 = vpop.f32.mrf.mxu0
        %v1095 = vadd.f32 0.0, %v1094
        %v1096 = vpop.f32.mrf.mxu0
        %1097 = vdwg.mxu0
        %v1098 = vmax.f32 %v984, %v1085
        %v1099 = vmax.f32 %v989, %v1090
        %v1100 = vmax.f32 %v994, %v1095
        %v1101 = vadd.s32 %v895, 2
        %v1102 = vadd.s32 %v896, 2
        %v1103 = vadd.s32 %v897, 2
        %vm1104 = vcmp.eq.s32.totalorder %v272, %v1101
        %vm1105 = vcmp.eq.s32.totalorder %v272, %v1102
        %vm1106 = vcmp.eq.s32.totalorder %v272, %v1103
        %v1107 = vsel %vm1104, 1, 0
        %v1108 = vsel %vm1105, 1, 0
        %v1109 = vsel %vm1106, 1, 0
        %v1110 = vcvt.s32.f32 %v1107
        %v1111 = vcvt.s32.f32 %v1108
        %v1112 = vcvt.s32.f32 %v1109
        %v1114 = vsel %vm907, %v1110, 0
        %v1117 = vsel %vm907, %v1111, 0
        %v1120 = vsel %vm907, %v1112, 0
        %1122 = vmatprep.subr.mxu0 0.0
        %1123 = vmatpush1.msra.mxu0 0.0
        %1124 = vmatprep.subr.mxu0 0.0
        %1125 = vmatpush1.msra.mxu0 0.0
        %1126 = vmatprep.subr.mxu0 0.0
        %1127 = vmatpush1.msra.mxu0 0.0
        %1128 = vmatprep.subr.mxu0 0.0
        %1129 = vmatpush1.msra.mxu0 0.0
        %1130 = vmatprep.subr.mxu0 0.0
        %1131 = vmatpush1.msra.mxu0 0.0
        %1132 = vmatprep.subr.mxu0 0.0
        %1133 = vmatpush1.msra.mxu0 0.0
        %1134 = vmatprep.subr.mxu0 0.0
        %1135 = vmatpush1.msra.mxu0 0.0
        %1136 = vmatprep.subr.mxu0 0.0
        %1137 = vmatpush1.msra.mxu0 %v890
        %1138 = vmatprep.subr.mxu0 0.0
        %1139 = vmatpush1.msra.mxu0 %v889
        %1140 = vmatprep.subr.mxu0 0.0
        %1141 = vmatpush1.msra.mxu0 %v888
        %1142 = vmatprep.subr.mxu0 0.0
        %1143 = vmatpush1.msra.mxu0 %v887
        %1144 = vmatprep.subr.mxu0 0.0
        %1145 = vmatpush1.msra.mxu0 %v886
        %1146 = vmatprep.subr.mxu0 0.0
        %1147 = vmatpush1.msra.mxu0 %v885
        %1148 = vmatprep.subr.mxu0 0.0
        %1149 = vmatpush1.msra.mxu0 %v884
        %1150 = vmatprep.subr.mxu0 0.0
        %1151 = vmatpush1.msra.mxu0 %v883
        %1152 = vmatprep.subr.mxu0 0.0
        %1153 = vmatpush1.msra.mxu0 %v882
        %1154 = vmatprep.subr.mxu0 0.0
        %1155 = vmatpush2.msra.mxu0 0.0
        %1156 = vmatprep.subr.mxu0 0.0
        %1157 = vmatpush2.msra.mxu0 0.0
        %1158 = vmatprep.subr.mxu0 0.0
        %1159 = vmatpush2.msra.mxu0 0.0
        %1160 = vmatprep.subr.mxu0 0.0
        %1161 = vmatpush2.msra.mxu0 0.0
        %1162 = vmatprep.subr.mxu0 0.0
        %1163 = vmatpush2.msra.mxu0 0.0
        %1164 = vmatprep.subr.mxu0 0.0
        %1165 = vmatpush2.msra.mxu0 0.0
        %1166 = vmatprep.subr.mxu0 0.0
        %1167 = vmatpush2.msra.mxu0 0.0
        %1168 = vmatprep.subr.mxu0 0.0
        %1169 = vmatpush2.msra.mxu0 0.0
        %1170 = vmatprep.subr.mxu0 0.0
        %1171 = vmatpush2.msra.mxu0 0.0
        %1172 = vmatprep.subr.mxu0 0.0
        %1173 = vmatpush2.msra.mxu0 0.0
        %1174 = vmatprep.subr.mxu0 0.0
        %1175 = vmatpush2.msra.mxu0 0.0
        %1176 = vmatprep.subr.mxu0 0.0
        %1177 = vmatpush2.msra.mxu0 0.0
        %1178 = vmatprep.subr.mxu0 0.0
        %1179 = vmatpush2.msra.mxu0 0.0
        %1180 = vmatprep.subr.mxu0 0.0
        %1181 = vmatpush2.msra.mxu0 0.0
        %1182 = vmatprep.subr.mxu0 0.0
        %1183 = vmatpush2.msra.mxu0 0.0
        %1184 = vmatprep.subr.mxu0 0.0
        %1185 = vmatpush2.msra.mxu0 0.0
        %1186 = vmatprep.mubr.f32.mxu0 0.0
        %1187 = vmatmul.mubr.f32.gmra.mxu0 %v1114
        %v1188 = vpop.f32.mrf.mxu0
        %v1189 = vadd.f32 0.0, %v1188
        %v1190 = vpop.f32.mrf.mxu0
        %1191 = vmatprep.mubr.f32.mxu0 0.0
        %1192 = vmatmul.mubr.f32.gmra.mxu0 %v1117
        %v1193 = vpop.f32.mrf.mxu0
        %v1194 = vadd.f32 0.0, %v1193
        %v1195 = vpop.f32.mrf.mxu0
        %1196 = vmatprep.mubr.f32.mxu0 0.0
        %1197 = vmatmul.mubr.f32.gmra.mxu0 %v1120
        %v1198 = vpop.f32.mrf.mxu0
        %v1199 = vadd.f32 0.0, %v1198
        %v1200 = vpop.f32.mrf.mxu0
        %1201 = vdwg.mxu0
        %v1202 = vmax.f32 %v1098, %v1189
        %v1203 = vmax.f32 %v1099, %v1194
        %v1204 = vmax.f32 %v1100, %v1199
        %s1205 = scalar_lea.vmem [#allocation2], 192
        %v1206 = vld [vmem:[%s1205] sm:$0xf]
        %v1207 = vld [vmem:[%s1205 + $0x4] sm:$0xf]
        %v1208 = vld [vmem:[%s1205 + $0x8] sm:$0xf]
        %v1209 = vld [vmem:[%s1205 + $0xc] sm:$0xf]
        %v1210 = vld [vmem:[%s1205 + $0x10] sm:$0xf]
        %v1211 = vld [vmem:[%s1205 + $0x14] sm:$0xf]
        %v1212 = vld [vmem:[%s1205 + $0x18] sm:$0xf]
        %v1213 = vld [vmem:[%s1205 + $0x1c] sm:$0xf]
        %v1214 = vld [vmem:[%s1205 + $0x20] sm:$0xf]
        %v1215 = vld [vmem:[%s1205 + $0x24] sm:$0xf]
        %v1216 = vld [vmem:[%s1205 + $0x28] sm:$0xf]
        %v1217 = vld [vmem:[%s1205 + $0x2c] sm:$0xf]
        %v1218 = vld [vmem:[%s1205 + $0x30] sm:$0xf]
        %v1219 = vld [vmem:[%s1205 + $0x34] sm:$0xf]
        %v1220 = vld [vmem:[%s1205 + $0x38] sm:$0xf]
        %v1221 = vld [vmem:[%s1205 + $0x3c] sm:$0xf]
        %v1222 = vpack.c.bf16 %v1203, %v1202
        %v1223 = vpack.c.bf16 %v1204, %v1204
        %v1224 = vld [vmem:[%s2 + $0x3] sm:$0x1]
        %v1225 = vlaneseq
        %v1226 = vshrl.u32 %v1225, 7
        %v1227 = vsub.s32 0, %v1226
        %v1228 = vrot.slane %v1224, %v1227
        %v1245 = vunpack.c.l.b16 %v1206
        %v1246 = vunpack.c.l.b16 %v1207
        %v1247 = vunpack.c.l.b16 %v1208
        %v1248 = vunpack.c.l.b16 %v1209
        %v1249 = vunpack.c.l.b16 %v1210
        %v1250 = vunpack.c.l.b16 %v1211
        %v1251 = vunpack.c.l.b16 %v1212
        %v1252 = vunpack.c.l.b16 %v1213
        %v1253 = vunpack.c.l.b16 %v1214
        %v1254 = vunpack.c.l.b16 %v1215
        %v1255 = vunpack.c.l.b16 %v1216
        %v1256 = vunpack.c.l.b16 %v1217
        %v1257 = vunpack.c.l.b16 %v1218
        %v1258 = vunpack.c.l.b16 %v1219
        %v1259 = vunpack.c.l.b16 %v1220
        %v1260 = vunpack.c.l.b16 %v1221
        %v1261 = vpack.c.b16 %v1246, %v1245
        %v1262 = vpack.c.b16 %v1248, %v1247
        %v1263 = vpack.c.b16 %v1250, %v1249
        %v1264 = vpack.c.b16 %v1252, %v1251
        %v1265 = vpack.c.b16 %v1254, %v1253
        %v1266 = vpack.c.b16 %v1256, %v1255
        %v1267 = vpack.c.b16 %v1258, %v1257
        %v1268 = vpack.c.b16 %v1260, %v1259
        %1277 = vmatprep.subr.bf16.mxu0 0
        %1278 = vmatpush1.bf16.msra.mxu0 %v1268
        %1279 = vmatprep.subr.bf16.mxu0 0
        %1280 = vmatpush1.bf16.msra.mxu0 %v1267
        %1281 = vmatprep.subr.bf16.mxu0 0
        %1282 = vmatpush1.bf16.msra.mxu0 %v1266
        %1283 = vmatprep.subr.bf16.mxu0 0
        %1284 = vmatpush1.bf16.msra.mxu0 %v1265
        %1285 = vmatprep.subr.bf16.mxu0 0
        %1286 = vmatpush1.bf16.msra.mxu0 %v1264
        %1287 = vmatprep.subr.bf16.mxu0 0
        %1288 = vmatpush1.bf16.msra.mxu0 %v1263
        %1289 = vmatprep.subr.bf16.mxu0 0
        %1290 = vmatpush1.bf16.msra.mxu0 %v1262
        %1291 = vmatprep.subr.bf16.mxu0 0
        %1292 = vmatpush1.bf16.msra.mxu0 %v1261
        %1293 = vmatprep.subr.bf16.mxu0 0
        %1294 = vmatpush2.bf16.msra.mxu0 0
        %1295 = vmatprep.subr.bf16.mxu0 0
        %1296 = vmatpush2.bf16.msra.mxu0 0
        %1297 = vmatprep.subr.bf16.mxu0 0
        %1298 = vmatpush2.bf16.msra.mxu0 0
        %1299 = vmatprep.subr.bf16.mxu0 0
        %1300 = vmatpush2.bf16.msra.mxu0 0
        %1301 = vmatprep.subr.bf16.mxu0 0
        %1302 = vmatpush2.bf16.msra.mxu0 0
        %1303 = vmatprep.subr.bf16.mxu0 0
        %1304 = vmatpush2.bf16.msra.mxu0 0
        %1305 = vmatprep.subr.bf16.mxu0 0
        %1306 = vmatpush2.bf16.msra.mxu0 0
        %1307 = vmatprep.subr.bf16.mxu0 0
        %1308 = vmatpush2.bf16.msra.mxu0 0
        %1309 = vmatprep.mubr.bf16.mxu0 0
        %1310 = vmatmul.mubr.bf16.gmra.mxu0 %v1222
        %v1311 = vpop.f32.mrf.mxu0
        %v1312 = vadd.f32 %v1228, %v1311
        %v1313 = vpop.f32.mrf.mxu0
        %v1314 = vpop.f32.mrf.mxu0
        %v1315 = vadd.f32 %v1228, %v1314
        %v1316 = vpop.f32.mrf.mxu0
        %1317 = vmatprep.mubr.bf16.mxu0 0
        %1318 = vmatmul.mubr.bf16.gmra.mxu0 %v1223
        %v1319 = vpop.f32.mrf.mxu0
        %v1320 = vadd.f32 %v1228, %v1319
        %v1321 = vpop.f32.mrf.mxu0
        %v1322 = vpop.f32.mrf.mxu0
        %v1323 = vpop.f32.mrf.mxu0
        %1324 = vdwg.mxu0
        %s1325 = sld [smem:[#allocation6 + $0x2]]
        %vm1326 = vcmp.gt.f32.partialorder %v1312, 0.0
        %vm1327 = vcmp.gt.f32.partialorder %v1315, 0.0
        %vm1328 = vcmp.gt.f32.partialorder %v1320, 0.0
        %v1329 = vstv %s1325
        %v1330 = vmul.f32 %v1329, %v1312
        %v1331 = vmul.f32 %v1329, %v1315
        %v1332 = vmul.f32 %v1329, %v1320
        %v1333 = vsel %vm1326, %v1312, %v1330
        %v1334 = vsel %vm1327, %v1315, %v1331
        %v1335 = vsel %vm1328, %v1320, %v1332
        %s1336 = scalar_lea.vmem [#allocation2], 256
        %v1337 = vld [vmem:[%s1336] sm:$0xf]
        %v1338 = vld [vmem:[%s1336 + $0x4] sm:$0xf]
        %v1339 = vld [vmem:[%s1336 + $0x8] sm:$0xf]
        %v1340 = vld [vmem:[%s1336 + $0xc] sm:$0xf]
        %v1341 = vld [vmem:[%s1336 + $0x10] sm:$0xf]
        %v1342 = vld [vmem:[%s1336 + $0x14] sm:$0xf]
        %v1343 = vld [vmem:[%s1336 + $0x18] sm:$0xf]
        %v1344 = vld [vmem:[%s1336 + $0x1c] sm:$0xf]
        %v1345 = vld [vmem:[%s1336 + $0x20] sm:$0xf]
        %v1346 = vld [vmem:[%s1336 + $0x24] sm:$0xf]
        %v1347 = vld [vmem:[%s1336 + $0x28] sm:$0xf]
        %v1348 = vld [vmem:[%s1336 + $0x2c] sm:$0xf]
        %v1349 = vld [vmem:[%s1336 + $0x30] sm:$0xf]
        %v1350 = vld [vmem:[%s1336 + $0x34] sm:$0xf]
        %v1351 = vld [vmem:[%s1336 + $0x38] sm:$0xf]
        %v1352 = vld [vmem:[%s1336 + $0x3c] sm:$0xf]
        %v1353 = vpack.c.bf16 %v1334, %v1333
        %v1354 = vpack.c.bf16 %v1335, %v1335
        %v1355 = vld [vmem:[%s2 + $0x4] sm:$0x1]
        %v1356 = vlaneseq
        %v1357 = vshrl.u32 %v1356, 7
        %v1358 = vsub.s32 0, %v1357
        %v1359 = vrot.slane %v1355, %v1358
        %v1376 = vunpack.c.l.b16 %v1337
        %v1377 = vunpack.c.l.b16 %v1338
        %v1378 = vunpack.c.l.b16 %v1339
        %v1379 = vunpack.c.l.b16 %v1340
        %v1380 = vunpack.c.l.b16 %v1341
        %v1381 = vunpack.c.l.b16 %v1342
        %v1382 = vunpack.c.l.b16 %v1343
        %v1383 = vunpack.c.l.b16 %v1344
        %v1384 = vunpack.c.l.b16 %v1345
        %v1385 = vunpack.c.l.b16 %v1346
        %v1386 = vunpack.c.l.b16 %v1347
        %v1387 = vunpack.c.l.b16 %v1348
        %v1388 = vunpack.c.l.b16 %v1349
        %v1389 = vunpack.c.l.b16 %v1350
        %v1390 = vunpack.c.l.b16 %v1351
        %v1391 = vunpack.c.l.b16 %v1352
        %v1392 = vpack.c.b16 %v1377, %v1376
        %v1393 = vpack.c.b16 %v1379, %v1378
        %v1394 = vpack.c.b16 %v1381, %v1380
        %v1395 = vpack.c.b16 %v1383, %v1382
        %v1396 = vpack.c.b16 %v1385, %v1384
        %v1397 = vpack.c.b16 %v1387, %v1386
        %v1398 = vpack.c.b16 %v1389, %v1388
        %v1399 = vpack.c.b16 %v1391, %v1390
        %1408 = vmatprep.subr.bf16.mxu0 0
        %1409 = vmatpush1.bf16.msra.mxu0 %v1399
        %1410 = vmatprep.subr.bf16.mxu0 0
        %1411 = vmatpush1.bf16.msra.mxu0 %v1398
        %1412 = vmatprep.subr.bf16.mxu0 0
        %1413 = vmatpush1.bf16.msra.mxu0 %v1397
        %1414 = vmatprep.subr.bf16.mxu0 0
        %1415 = vmatpush1.bf16.msra.mxu0 %v1396
        %1416 = vmatprep.subr.bf16.mxu0 0
        %1417 = vmatpush1.bf16.msra.mxu0 %v1395
        %1418 = vmatprep.subr.bf16.mxu0 0
        %1419 = vmatpush1.bf16.msra.mxu0 %v1394
        %1420 = vmatprep.subr.bf16.mxu0 0
        %1421 = vmatpush1.bf16.msra.mxu0 %v1393
        %1422 = vmatprep.subr.bf16.mxu0 0
        %1423 = vmatpush1.bf16.msra.mxu0 %v1392
        %1424 = vmatprep.subr.bf16.mxu0 0
        %1425 = vmatpush2.bf16.msra.mxu0 0
        %1426 = vmatprep.subr.bf16.mxu0 0
        %1427 = vmatpush2.bf16.msra.mxu0 0
        %1428 = vmatprep.subr.bf16.mxu0 0
        %1429 = vmatpush2.bf16.msra.mxu0 0
        %1430 = vmatprep.subr.bf16.mxu0 0
        %1431 = vmatpush2.bf16.msra.mxu0 0
        %1432 = vmatprep.subr.bf16.mxu0 0
        %1433 = vmatpush2.bf16.msra.mxu0 0
        %1434 = vmatprep.subr.bf16.mxu0 0
        %1435 = vmatpush2.bf16.msra.mxu0 0
        %1436 = vmatprep.subr.bf16.mxu0 0
        %1437 = vmatpush2.bf16.msra.mxu0 0
        %1438 = vmatprep.subr.bf16.mxu0 0
        %1439 = vmatpush2.bf16.msra.mxu0 0
        %1440 = vmatprep.mubr.bf16.mxu0 0
        %1441 = vmatmul.mubr.bf16.gmra.mxu0 %v1353
        %v1442 = vpop.f32.mrf.mxu0
        %v1443 = vadd.f32 %v1359, %v1442
        %v1444 = vpop.f32.mrf.mxu0
        %v1445 = vpop.f32.mrf.mxu0
        %v1446 = vadd.f32 %v1359, %v1445
        %v1447 = vpop.f32.mrf.mxu0
        %1448 = vmatprep.mubr.bf16.mxu0 0
        %1449 = vmatmul.mubr.bf16.gmra.mxu0 %v1354
        %v1450 = vpop.f32.mrf.mxu0
        %v1451 = vadd.f32 %v1359, %v1450
        %v1452 = vpop.f32.mrf.mxu0
        %v1453 = vpop.f32.mrf.mxu0
        %v1454 = vpop.f32.mrf.mxu0
        %1455 = vdwg.mxu0
        %s1456 = scalar_lea.vmem [#allocation2], 320
        %v1457 = vld [vmem:[%s1456] sm:$0xf]
        %v1458 = vld [vmem:[%s1456 + $0x4] sm:$0xf]
        %v1459 = vld [vmem:[%s1456 + $0x8] sm:$0xf]
        %v1460 = vld [vmem:[%s1456 + $0xc] sm:$0xf]
        %v1461 = vld [vmem:[%s1456 + $0x10] sm:$0xf]
        %v1462 = vld [vmem:[%s1456 + $0x14] sm:$0xf]
        %v1463 = vld [vmem:[%s1456 + $0x18] sm:$0xf]
        %v1464 = vld [vmem:[%s1456 + $0x1c] sm:$0xf]
        %v1465 = vld [vmem:[%s1456 + $0x20] sm:$0xf]
        %v1466 = vld [vmem:[%s1456 + $0x24] sm:$0xf]
        %v1467 = vld [vmem:[%s1456 + $0x28] sm:$0xf]
        %v1468 = vld [vmem:[%s1456 + $0x2c] sm:$0xf]
        %v1469 = vld [vmem:[%s1456 + $0x30] sm:$0xf]
        %v1470 = vld [vmem:[%s1456 + $0x34] sm:$0xf]
        %v1471 = vld [vmem:[%s1456 + $0x38] sm:$0xf]
        %v1472 = vld [vmem:[%s1456 + $0x3c] sm:$0xf]
        %v1489 = vunpack.c.l.b16 %v1457
        %v1490 = vunpack.c.l.b16 %v1458
        %v1491 = vunpack.c.l.b16 %v1459
        %v1492 = vunpack.c.l.b16 %v1460
        %v1493 = vunpack.c.l.b16 %v1461
        %v1494 = vunpack.c.l.b16 %v1462
        %v1495 = vunpack.c.l.b16 %v1463
        %v1496 = vunpack.c.l.b16 %v1464
        %v1497 = vunpack.c.l.b16 %v1465
        %v1498 = vunpack.c.l.b16 %v1466
        %v1499 = vunpack.c.l.b16 %v1467
        %v1500 = vunpack.c.l.b16 %v1468
        %v1501 = vunpack.c.l.b16 %v1469
        %v1502 = vunpack.c.l.b16 %v1470
        %v1503 = vunpack.c.l.b16 %v1471
        %v1504 = vunpack.c.l.b16 %v1472
        %v1505 = vpack.c.b16 %v1490, %v1489
        %v1506 = vpack.c.b16 %v1492, %v1491
        %v1507 = vpack.c.b16 %v1494, %v1493
        %v1508 = vpack.c.b16 %v1496, %v1495
        %v1509 = vpack.c.b16 %v1498, %v1497
        %v1510 = vpack.c.b16 %v1500, %v1499
        %v1511 = vpack.c.b16 %v1502, %v1501
        %v1512 = vpack.c.b16 %v1504, %v1503
        %1521 = vmatprep.subr.bf16.mxu0 0
        %1522 = vmatpush1.bf16.msra.mxu0 %v1512
        %1523 = vmatprep.subr.bf16.mxu0 0
        %1524 = vmatpush1.bf16.msra.mxu0 %v1511
        %1525 = vmatprep.subr.bf16.mxu0 0
        %1526 = vmatpush1.bf16.msra.mxu0 %v1510
        %1527 = vmatprep.subr.bf16.mxu0 0
        %1528 = vmatpush1.bf16.msra.mxu0 %v1509
        %1529 = vmatprep.subr.bf16.mxu0 0
        %1530 = vmatpush1.bf16.msra.mxu0 %v1508
        %1531 = vmatprep.subr.bf16.mxu0 0
        %1532 = vmatpush1.bf16.msra.mxu0 %v1507
        %1533 = vmatprep.subr.bf16.mxu0 0
        %1534 = vmatpush1.bf16.msra.mxu0 %v1506
        %1535 = vmatprep.subr.bf16.mxu0 0
        %1536 = vmatpush1.bf16.msra.mxu0 %v1505
        %1537 = vmatprep.subr.bf16.mxu0 0
        %1538 = vmatpush2.bf16.msra.mxu0 0
        %1539 = vmatprep.subr.bf16.mxu0 0
        %1540 = vmatpush2.bf16.msra.mxu0 0
        %1541 = vmatprep.subr.bf16.mxu0 0
        %1542 = vmatpush2.bf16.msra.mxu0 0
        %1543 = vmatprep.subr.bf16.mxu0 0
        %1544 = vmatpush2.bf16.msra.mxu0 0
        %1545 = vmatprep.subr.bf16.mxu0 0
        %1546 = vmatpush2.bf16.msra.mxu0 0
        %1547 = vmatprep.subr.bf16.mxu0 0
        %1548 = vmatpush2.bf16.msra.mxu0 0
        %1549 = vmatprep.subr.bf16.mxu0 0
        %1550 = vmatpush2.bf16.msra.mxu0 0
        %1551 = vmatprep.subr.bf16.mxu0 0
        %1552 = vmatpush2.bf16.msra.mxu0 0
        %1553 = vmatprep.mubr.bf16.mxu0 0
        %1554 = vmatmul.mubr.bf16.gmra.mxu0 %v1222
        %v1555 = vpop.f32.mrf.mxu0
        %v1556 = vadd.f32 0.0, %v1555
        %v1557 = vpop.f32.mrf.mxu0
        %v1558 = vpop.f32.mrf.mxu0
        %v1559 = vadd.f32 0.0, %v1558
        %v1560 = vpop.f32.mrf.mxu0
        %1561 = vmatprep.mubr.bf16.mxu0 0
        %1562 = vmatmul.mubr.bf16.gmra.mxu0 %v1223
        %v1563 = vpop.f32.mrf.mxu0
        %v1564 = vadd.f32 0.0, %v1563
        %v1565 = vpop.f32.mrf.mxu0
        %v1566 = vpop.f32.mrf.mxu0
        %v1567 = vpop.f32.mrf.mxu0
        %1568 = vdwg.mxu0
        %v1569 = vadd.f32 %v1443, %v1556
        %v1570 = vadd.f32 %v1446, %v1559
        %v1571 = vadd.f32 %v1451, %v1564
        %s1572 = sld [smem:[#allocation6 + $0x3]]
        %vm1573 = vcmp.gt.f32.partialorder %v1569, 0.0
        %vm1574 = vcmp.gt.f32.partialorder %v1570, 0.0
        %vm1575 = vcmp.gt.f32.partialorder %v1571, 0.0
        %v1576 = vstv %s1572
        %v1577 = vmul.f32 %v1576, %v1569
        %v1578 = vmul.f32 %v1576, %v1570
        %v1579 = vmul.f32 %v1576, %v1571
        %v1580 = vsel %vm1573, %v1569, %v1577
        %v1581 = vsel %vm1574, %v1570, %v1578
        %v1582 = vsel %vm1575, %v1571, %v1579
        %vm1583 = vcmask 195584
        %v1584 = vsel %vm1583, %v904, 0
        %1586 = vmatprep.subr.mxu0 0.0
        %1587 = vmatpush1.msra.mxu0 0.0
        %1588 = vmatprep.subr.mxu0 0.0
        %1589 = vmatpush1.msra.mxu0 0.0
        %1590 = vmatprep.subr.mxu0 0.0
        %1591 = vmatpush1.msra.mxu0 0.0
        %1592 = vmatprep.subr.mxu0 0.0
        %1593 = vmatpush1.msra.mxu0 0.0
        %1594 = vmatprep.subr.mxu0 0.0
        %1595 = vmatpush1.msra.mxu0 0.0
        %1596 = vmatprep.subr.mxu0 0.0
        %1597 = vmatpush1.msra.mxu0 0.0
        %1598 = vmatprep.subr.mxu0 0.0
        %1599 = vmatpush1.msra.mxu0 0.0
        %1600 = vmatprep.subr.mxu0 0.0
        %1601 = vmatpush1.msra.mxu0 0.0
        %1602 = vmatprep.subr.mxu0 0.0
        %1603 = vmatpush1.msra.mxu0 0.0
        %1604 = vmatprep.subr.mxu0 0.0
        %1605 = vmatpush1.msra.mxu0 0.0
        %1606 = vmatprep.subr.mxu0 0.0
        %1607 = vmatpush1.msra.mxu0 0.0
        %1608 = vmatprep.subr.mxu0 0.0
        %1609 = vmatpush1.msra.mxu0 0.0
        %1610 = vmatprep.subr.mxu0 0.0
        %1611 = vmatpush1.msra.mxu0 0.0
        %1612 = vmatprep.subr.mxu0 0.0
        %1613 = vmatpush1.msra.mxu0 %v1582
        %1614 = vmatprep.subr.mxu0 0.0
        %1615 = vmatpush1.msra.mxu0 %v1581
        %1616 = vmatprep.subr.mxu0 0.0
        %1617 = vmatpush1.msra.mxu0 %v1580
        %1618 = vmatprep.subr.mxu0 0.0
        %1619 = vmatpush2.msra.mxu0 0.0
        %1620 = vmatprep.subr.mxu0 0.0
        %1621 = vmatpush2.msra.mxu0 0.0
        %1622 = vmatprep.subr.mxu0 0.0
        %1623 = vmatpush2.msra.mxu0 0.0
        %1624 = vmatprep.subr.mxu0 0.0
        %1625 = vmatpush2.msra.mxu0 0.0
        %1626 = vmatprep.subr.mxu0 0.0
        %1627 = vmatpush2.msra.mxu0 0.0
        %1628 = vmatprep.subr.mxu0 0.0
        %1629 = vmatpush2.msra.mxu0 0.0
        %1630 = vmatprep.subr.mxu0 0.0
        %1631 = vmatpush2.msra.mxu0 0.0
        %1632 = vmatprep.subr.mxu0 0.0
        %1633 = vmatpush2.msra.mxu0 0.0
        %1634 = vmatprep.subr.mxu0 0.0
        %1635 = vmatpush2.msra.mxu0 0.0
        %1636 = vmatprep.subr.mxu0 0.0
        %1637 = vmatpush2.msra.mxu0 0.0
        %1638 = vmatprep.subr.mxu0 0.0
        %1639 = vmatpush2.msra.mxu0 0.0
        %1640 = vmatprep.subr.mxu0 0.0
        %1641 = vmatpush2.msra.mxu0 0.0
        %1642 = vmatprep.subr.mxu0 0.0
        %1643 = vmatpush2.msra.mxu0 0.0
        %1644 = vmatprep.subr.mxu0 0.0
        %1645 = vmatpush2.msra.mxu0 0.0
        %1646 = vmatprep.subr.mxu0 0.0
        %1647 = vmatpush2.msra.mxu0 0.0
        %1648 = vmatprep.subr.mxu0 0.0
        %1649 = vmatpush2.msra.mxu0 0.0
        %1650 = vmatprep.mubr.f32.mxu0 0.0
        %1651 = vmatmul.mubr.f32.gmra.mxu0 %v1584
        %v1652 = vpop.f32.mrf.mxu0
        %v1653 = vadd.f32 0.0, %v1652
        %v1654 = vpop.f32.mrf.mxu0
        %1655 = vdwg.mxu0
        %v1656 = vsel %vm1583, %v1006, 0
        %1658 = vmatprep.subr.mxu0 0.0
        %1659 = vmatpush1.msra.mxu0 0.0
        %1660 = vmatprep.subr.mxu0 0.0
        %1661 = vmatpush1.msra.mxu0 0.0
        %1662 = vmatprep.subr.mxu0 0.0
        %1663 = vmatpush1.msra.mxu0 0.0
        %1664 = vmatprep.subr.mxu0 0.0
        %1665 = vmatpush1.msra.mxu0 0.0
        %1666 = vmatprep.subr.mxu0 0.0
        %1667 = vmatpush1.msra.mxu0 0.0
        %1668 = vmatprep.subr.mxu0 0.0
        %1669 = vmatpush1.msra.mxu0 0.0
        %1670 = vmatprep.subr.mxu0 0.0
        %1671 = vmatpush1.msra.mxu0 0.0
        %1672 = vmatprep.subr.mxu0 0.0
        %1673 = vmatpush1.msra.mxu0 0.0
        %1674 = vmatprep.subr.mxu0 0.0
        %1675 = vmatpush1.msra.mxu0 0.0
        %1676 = vmatprep.subr.mxu0 0.0
        %1677 = vmatpush1.msra.mxu0 0.0
        %1678 = vmatprep.subr.mxu0 0.0
        %1679 = vmatpush1.msra.mxu0 0.0
        %1680 = vmatprep.subr.mxu0 0.0
        %1681 = vmatpush1.msra.mxu0 0.0
        %1682 = vmatprep.subr.mxu0 0.0
        %1683 = vmatpush1.msra.mxu0 0.0
        %1684 = vmatprep.subr.mxu0 0.0
        %1685 = vmatpush1.msra.mxu0 %v1582
        %1686 = vmatprep.subr.mxu0 0.0
        %1687 = vmatpush1.msra.mxu0 %v1581
        %1688 = vmatprep.subr.mxu0 0.0
        %1689 = vmatpush1.msra.mxu0 %v1580
        %1690 = vmatprep.subr.mxu0 0.0
        %1691 = vmatpush2.msra.mxu0 0.0
        %1692 = vmatprep.subr.mxu0 0.0
        %1693 = vmatpush2.msra.mxu0 0.0
        %1694 = vmatprep.subr.mxu0 0.0
        %1695 = vmatpush2.msra.mxu0 0.0
        %1696 = vmatprep.subr.mxu0 0.0
        %1697 = vmatpush2.msra.mxu0 0.0
        %1698 = vmatprep.subr.mxu0 0.0
        %1699 = vmatpush2.msra.mxu0 0.0
        %1700 = vmatprep.subr.mxu0 0.0
        %1701 = vmatpush2.msra.mxu0 0.0
        %1702 = vmatprep.subr.mxu0 0.0
        %1703 = vmatpush2.msra.mxu0 0.0
        %1704 = vmatprep.subr.mxu0 0.0
        %1705 = vmatpush2.msra.mxu0 0.0
        %1706 = vmatprep.subr.mxu0 0.0
        %1707 = vmatpush2.msra.mxu0 0.0
        %1708 = vmatprep.subr.mxu0 0.0
        %1709 = vmatpush2.msra.mxu0 0.0
        %1710 = vmatprep.subr.mxu0 0.0
        %1711 = vmatpush2.msra.mxu0 0.0
        %1712 = vmatprep.subr.mxu0 0.0
        %1713 = vmatpush2.msra.mxu0 0.0
        %1714 = vmatprep.subr.mxu0 0.0
        %1715 = vmatpush2.msra.mxu0 0.0
        %1716 = vmatprep.subr.mxu0 0.0
        %1717 = vmatpush2.msra.mxu0 0.0
        %1718 = vmatprep.subr.mxu0 0.0
        %1719 = vmatpush2.msra.mxu0 0.0
        %1720 = vmatprep.subr.mxu0 0.0
        %1721 = vmatpush2.msra.mxu0 0.0
        %1722 = vmatprep.mubr.f32.mxu0 0.0
        %1723 = vmatmul.mubr.f32.gmra.mxu0 %v1656
        %v1724 = vpop.f32.mrf.mxu0
        %v1725 = vadd.f32 0.0, %v1724
        %v1726 = vpop.f32.mrf.mxu0
        %1727 = vdwg.mxu0
        %v1728 = vmax.f32 %v1653, %v1725
        %v1729 = vsel %vm1583, %v1110, 0
        %1731 = vmatprep.subr.mxu0 0.0
        %1732 = vmatpush1.msra.mxu0 0.0
        %1733 = vmatprep.subr.mxu0 0.0
        %1734 = vmatpush1.msra.mxu0 0.0
        %1735 = vmatprep.subr.mxu0 0.0
        %1736 = vmatpush1.msra.mxu0 0.0
        %1737 = vmatprep.subr.mxu0 0.0
        %1738 = vmatpush1.msra.mxu0 0.0
        %1739 = vmatprep.subr.mxu0 0.0
        %1740 = vmatpush1.msra.mxu0 0.0
        %1741 = vmatprep.subr.mxu0 0.0
        %1742 = vmatpush1.msra.mxu0 0.0
        %1743 = vmatprep.subr.mxu0 0.0
        %1744 = vmatpush1.msra.mxu0 0.0
        %1745 = vmatprep.subr.mxu0 0.0
        %1746 = vmatpush1.msra.mxu0 0.0
        %1747 = vmatprep.subr.mxu0 0.0
        %1748 = vmatpush1.msra.mxu0 0.0
        %1749 = vmatprep.subr.mxu0 0.0
        %1750 = vmatpush1.msra.mxu0 0.0
        %1751 = vmatprep.subr.mxu0 0.0
        %1752 = vmatpush1.msra.mxu0 0.0
        %1753 = vmatprep.subr.mxu0 0.0
        %1754 = vmatpush1.msra.mxu0 0.0
        %1755 = vmatprep.subr.mxu0 0.0
        %1756 = vmatpush1.msra.mxu0 0.0
        %1757 = vmatprep.subr.mxu0 0.0
        %1758 = vmatpush1.msra.mxu0 %v1582
        %1759 = vmatprep.subr.mxu0 0.0
        %1760 = vmatpush1.msra.mxu0 %v1581
        %1761 = vmatprep.subr.mxu0 0.0
        %1762 = vmatpush1.msra.mxu0 %v1580
        %1763 = vmatprep.subr.mxu0 0.0
        %1764 = vmatpush2.msra.mxu0 0.0
        %1765 = vmatprep.subr.mxu0 0.0
        %1766 = vmatpush2.msra.mxu0 0.0
        %1767 = vmatprep.subr.mxu0 0.0
        %1768 = vmatpush2.msra.mxu0 0.0
        %1769 = vmatprep.subr.mxu0 0.0
        %1770 = vmatpush2.msra.mxu0 0.0
        %1771 = vmatprep.subr.mxu0 0.0
        %1772 = vmatpush2.msra.mxu0 0.0
        %1773 = vmatprep.subr.mxu0 0.0
        %1774 = vmatpush2.msra.mxu0 0.0
        %1775 = vmatprep.subr.mxu0 0.0
        %1776 = vmatpush2.msra.mxu0 0.0
        %1777 = vmatprep.subr.mxu0 0.0
        %1778 = vmatpush2.msra.mxu0 0.0
        %1779 = vmatprep.subr.mxu0 0.0
        %1780 = vmatpush2.msra.mxu0 0.0
        %1781 = vmatprep.subr.mxu0 0.0
        %1782 = vmatpush2.msra.mxu0 0.0
        %1783 = vmatprep.subr.mxu0 0.0
        %1784 = vmatpush2.msra.mxu0 0.0
        %1785 = vmatprep.subr.mxu0 0.0
        %1786 = vmatpush2.msra.mxu0 0.0
        %1787 = vmatprep.subr.mxu0 0.0
        %1788 = vmatpush2.msra.mxu0 0.0
        %1789 = vmatprep.subr.mxu0 0.0
        %1790 = vmatpush2.msra.mxu0 0.0
        %1791 = vmatprep.subr.mxu0 0.0
        %1792 = vmatpush2.msra.mxu0 0.0
        %1793 = vmatprep.subr.mxu0 0.0
        %1794 = vmatpush2.msra.mxu0 0.0
        %1795 = vmatprep.mubr.f32.mxu0 0.0
        %1796 = vmatmul.mubr.f32.gmra.mxu0 %v1729
        %v1797 = vpop.f32.mrf.mxu0
        %v1798 = vadd.f32 0.0, %v1797
        %v1799 = vpop.f32.mrf.mxu0
        %1800 = vdwg.mxu0
        %v1801 = vmax.f32 %v1728, %v1798
        %s1802 = scalar_lea.vmem [#allocation2], 384
        %v1803 = vld [vmem:[%s1802] sm:$0xf]
        %v1804 = vld [vmem:[%s1802 + $0x4] sm:$0xf]
        %v1805 = vld [vmem:[%s1802 + $0x8] sm:$0xf]
        %v1806 = vld [vmem:[%s1802 + $0xc] sm:$0xf]
        %v1807 = vld [vmem:[%s1802 + $0x10] sm:$0xf]
        %v1808 = vld [vmem:[%s1802 + $0x14] sm:$0xf]
        %v1809 = vld [vmem:[%s1802 + $0x18] sm:$0xf]
        %v1810 = vld [vmem:[%s1802 + $0x1c] sm:$0xf]
        %v1811 = vld [vmem:[%s1802 + $0x20] sm:$0xf]
        %v1812 = vld [vmem:[%s1802 + $0x24] sm:$0xf]
        %v1813 = vld [vmem:[%s1802 + $0x28] sm:$0xf]
        %v1814 = vld [vmem:[%s1802 + $0x2c] sm:$0xf]
        %v1815 = vld [vmem:[%s1802 + $0x30] sm:$0xf]
        %v1816 = vld [vmem:[%s1802 + $0x34] sm:$0xf]
        %v1817 = vld [vmem:[%s1802 + $0x38] sm:$0xf]
        %v1818 = vld [vmem:[%s1802 + $0x3c] sm:$0xf]
        %v1819 = vpack.c.bf16 %v1801, %v1801
        %v1820 = vld [vmem:[%s2 + $0x5] sm:$0x1]
        %v1821 = vlaneseq
        %v1822 = vshrl.u32 %v1821, 7
        %v1823 = vsub.s32 0, %v1822
        %v1824 = vrot.slane %v1820, %v1823
        %v1841 = vunpack.c.l.b16 %v1803
        %v1842 = vunpack.c.l.b16 %v1804
        %v1843 = vunpack.c.l.b16 %v1805
        %v1844 = vunpack.c.l.b16 %v1806
        %v1845 = vunpack.c.l.b16 %v1807
        %v1846 = vunpack.c.l.b16 %v1808
        %v1847 = vunpack.c.l.b16 %v1809
        %v1848 = vunpack.c.l.b16 %v1810
        %v1849 = vunpack.c.l.b16 %v1811
        %v1850 = vunpack.c.l.b16 %v1812
        %v1851 = vunpack.c.l.b16 %v1813
        %v1852 = vunpack.c.l.b16 %v1814
        %v1853 = vunpack.c.l.b16 %v1815
        %v1854 = vunpack.c.l.b16 %v1816
        %v1855 = vunpack.c.l.b16 %v1817
        %v1856 = vunpack.c.l.b16 %v1818
        %v1857 = vpack.c.b16 %v1842, %v1841
        %v1858 = vpack.c.b16 %v1844, %v1843
        %v1859 = vpack.c.b16 %v1846, %v1845
        %v1860 = vpack.c.b16 %v1848, %v1847
        %v1861 = vpack.c.b16 %v1850, %v1849
        %v1862 = vpack.c.b16 %v1852, %v1851
        %v1863 = vpack.c.b16 %v1854, %v1853
        %v1864 = vpack.c.b16 %v1856, %v1855
        %1873 = vmatprep.subr.bf16.mxu0 0
        %1874 = vmatpush1.bf16.msra.mxu0 %v1864
        %1875 = vmatprep.subr.bf16.mxu0 0
        %1876 = vmatpush1.bf16.msra.mxu0 %v1863
        %1877 = vmatprep.subr.bf16.mxu0 0
        %1878 = vmatpush1.bf16.msra.mxu0 %v1862
        %1879 = vmatprep.subr.bf16.mxu0 0
        %1880 = vmatpush1.bf16.msra.mxu0 %v1861
        %1881 = vmatprep.subr.bf16.mxu0 0
        %1882 = vmatpush1.bf16.msra.mxu0 %v1860
        %1883 = vmatprep.subr.bf16.mxu0 0
        %1884 = vmatpush1.bf16.msra.mxu0 %v1859
        %1885 = vmatprep.subr.bf16.mxu0 0
        %1886 = vmatpush1.bf16.msra.mxu0 %v1858
        %1887 = vmatprep.subr.bf16.mxu0 0
        %1888 = vmatpush1.bf16.msra.mxu0 %v1857
        %1889 = vmatprep.subr.bf16.mxu0 0
        %1890 = vmatpush2.bf16.msra.mxu0 0
        %1891 = vmatprep.subr.bf16.mxu0 0
        %1892 = vmatpush2.bf16.msra.mxu0 0
        %1893 = vmatprep.subr.bf16.mxu0 0
        %1894 = vmatpush2.bf16.msra.mxu0 0
        %1895 = vmatprep.subr.bf16.mxu0 0
        %1896 = vmatpush2.bf16.msra.mxu0 0
        %1897 = vmatprep.subr.bf16.mxu0 0
        %1898 = vmatpush2.bf16.msra.mxu0 0
        %1899 = vmatprep.subr.bf16.mxu0 0
        %1900 = vmatpush2.bf16.msra.mxu0 0
        %1901 = vmatprep.subr.bf16.mxu0 0
        %1902 = vmatpush2.bf16.msra.mxu0 0
        %1903 = vmatprep.subr.bf16.mxu0 0
        %1904 = vmatpush2.bf16.msra.mxu0 0
        %1905 = vmatprep.mubr.bf16.mxu0 0
        %1906 = vmatmul.mubr.bf16.gmra.mxu0 %v1819
        %v1907 = vpop.f32.mrf.mxu0
        %v1908 = vadd.f32 %v1824, %v1907
        %v1909 = vpop.f32.mrf.mxu0
        %v1910 = vpop.f32.mrf.mxu0
        %v1911 = vpop.f32.mrf.mxu0
        %1912 = vdwg.mxu0
        %s1913 = sld [smem:[#allocation6 + $0x4]]
        %vm1914 = vcmp.gt.f32.partialorder %v1908, 0.0
        %v1915 = vstv %s1913
        %v1916 = vmul.f32 %v1915, %v1908
        %v1917 = vsel %vm1914, %v1908, %v1916
        %s1918 = scalar_lea.vmem [#allocation2], 448
        %v1919 = vld [vmem:[%s1918] sm:$0xf]
        %v1920 = vld [vmem:[%s1918 + $0x4] sm:$0xf]
        %v1921 = vld [vmem:[%s1918 + $0x8] sm:$0xf]
        %v1922 = vld [vmem:[%s1918 + $0xc] sm:$0xf]
        %v1923 = vld [vmem:[%s1918 + $0x10] sm:$0xf]
        %v1924 = vld [vmem:[%s1918 + $0x14] sm:$0xf]
        %v1925 = vld [vmem:[%s1918 + $0x18] sm:$0xf]
        %v1926 = vld [vmem:[%s1918 + $0x1c] sm:$0xf]
        %v1927 = vld [vmem:[%s1918 + $0x20] sm:$0xf]
        %v1928 = vld [vmem:[%s1918 + $0x24] sm:$0xf]
        %v1929 = vld [vmem:[%s1918 + $0x28] sm:$0xf]
        %v1930 = vld [vmem:[%s1918 + $0x2c] sm:$0xf]
        %v1931 = vld [vmem:[%s1918 + $0x30] sm:$0xf]
        %v1932 = vld [vmem:[%s1918 + $0x34] sm:$0xf]
        %v1933 = vld [vmem:[%s1918 + $0x38] sm:$0xf]
        %v1934 = vld [vmem:[%s1918 + $0x3c] sm:$0xf]
        %v1935 = vpack.c.bf16 %v1917, %v1917
        %v1936 = vld [vmem:[%s2 + $0x6] sm:$0x1]
        %v1937 = vlaneseq
        %v1938 = vshrl.u32 %v1937, 7
        %v1939 = vsub.s32 0, %v1938
        %v1940 = vrot.slane %v1936, %v1939
        %v1957 = vunpack.c.l.b16 %v1919
        %v1958 = vunpack.c.l.b16 %v1920
        %v1959 = vunpack.c.l.b16 %v1921
        %v1960 = vunpack.c.l.b16 %v1922
        %v1961 = vunpack.c.l.b16 %v1923
        %v1962 = vunpack.c.l.b16 %v1924
        %v1963 = vunpack.c.l.b16 %v1925
        %v1964 = vunpack.c.l.b16 %v1926
        %v1965 = vunpack.c.l.b16 %v1927
        %v1966 = vunpack.c.l.b16 %v1928
        %v1967 = vunpack.c.l.b16 %v1929
        %v1968 = vunpack.c.l.b16 %v1930
        %v1969 = vunpack.c.l.b16 %v1931
        %v1970 = vunpack.c.l.b16 %v1932
        %v1971 = vunpack.c.l.b16 %v1933
        %v1972 = vunpack.c.l.b16 %v1934
        %v1973 = vpack.c.b16 %v1958, %v1957
        %v1974 = vpack.c.b16 %v1960, %v1959
        %v1975 = vpack.c.b16 %v1962, %v1961
        %v1976 = vpack.c.b16 %v1964, %v1963
        %v1977 = vpack.c.b16 %v1966, %v1965
        %v1978 = vpack.c.b16 %v1968, %v1967
        %v1979 = vpack.c.b16 %v1970, %v1969
        %v1980 = vpack.c.b16 %v1972, %v1971
        %1989 = vmatprep.subr.bf16.mxu0 0
        %1990 = vmatpush1.bf16.msra.mxu0 %v1980
        %1991 = vmatprep.subr.bf16.mxu0 0
        %1992 = vmatpush1.bf16.msra.mxu0 %v1979
        %1993 = vmatprep.subr.bf16.mxu0 0
        %1994 = vmatpush1.bf16.msra.mxu0 %v1978
        %1995 = vmatprep.subr.bf16.mxu0 0
        %1996 = vmatpush1.bf16.msra.mxu0 %v1977
        %1997 = vmatprep.subr.bf16.mxu0 0
        %1998 = vmatpush1.bf16.msra.mxu0 %v1976
        %1999 = vmatprep.subr.bf16.mxu0 0
        %2000 = vmatpush1.bf16.msra.mxu0 %v1975
        %2001 = vmatprep.subr.bf16.mxu0 0
        %2002 = vmatpush1.bf16.msra.mxu0 %v1974
        %2003 = vmatprep.subr.bf16.mxu0 0
        %2004 = vmatpush1.bf16.msra.mxu0 %v1973
        %2005 = vmatprep.subr.bf16.mxu0 0
        %2006 = vmatpush2.bf16.msra.mxu0 0
        %2007 = vmatprep.subr.bf16.mxu0 0
        %2008 = vmatpush2.bf16.msra.mxu0 0
        %2009 = vmatprep.subr.bf16.mxu0 0
        %2010 = vmatpush2.bf16.msra.mxu0 0
        %2011 = vmatprep.subr.bf16.mxu0 0
        %2012 = vmatpush2.bf16.msra.mxu0 0
        %2013 = vmatprep.subr.bf16.mxu0 0
        %2014 = vmatpush2.bf16.msra.mxu0 0
        %2015 = vmatprep.subr.bf16.mxu0 0
        %2016 = vmatpush2.bf16.msra.mxu0 0
        %2017 = vmatprep.subr.bf16.mxu0 0
        %2018 = vmatpush2.bf16.msra.mxu0 0
        %2019 = vmatprep.subr.bf16.mxu0 0
        %2020 = vmatpush2.bf16.msra.mxu0 0
        %2021 = vmatprep.mubr.bf16.mxu0 0
        %2022 = vmatmul.mubr.bf16.gmra.mxu0 %v1935
        %v2023 = vpop.f32.mrf.mxu0
        %v2024 = vadd.f32 %v1940, %v2023
        %v2025 = vpop.f32.mrf.mxu0
        %v2026 = vpop.f32.mrf.mxu0
        %v2027 = vpop.f32.mrf.mxu0
        %2028 = vdwg.mxu0
        %v2029 = vadd.f32 %v2024, %v1801
        %s2030 = sld [smem:[#allocation6 + $0x5]]
        %vm2031 = vcmp.gt.f32.partialorder %v2029, 0.0
        %v2032 = vstv %s2030
        %v2033 = vmul.f32 %v2032, %v2029
        %v2034 = vsel %vm2031, %v2029, %v2033
        %vm2035 = vcmask 64512
        %v2036 = vsel %vm2035, %v904, 0
        %2038 = vmatprep.subr.mxu0 0.0
        %2039 = vmatpush1.msra.mxu0 0.0
        %2040 = vmatprep.subr.mxu0 0.0
        %2041 = vmatpush1.msra.mxu0 0.0
        %2042 = vmatprep.subr.mxu0 0.0
        %2043 = vmatpush1.msra.mxu0 0.0
        %2044 = vmatprep.subr.mxu0 0.0
        %2045 = vmatpush1.msra.mxu0 0.0
        %2046 = vmatprep.subr.mxu0 0.0
        %2047 = vmatpush1.msra.mxu0 0.0
        %2048 = vmatprep.subr.mxu0 0.0
        %2049 = vmatpush1.msra.mxu0 0.0
        %2050 = vmatprep.subr.mxu0 0.0
        %2051 = vmatpush1.msra.mxu0 0.0
        %2052 = vmatprep.subr.mxu0 0.0
        %2053 = vmatpush1.msra.mxu0 0.0
        %2054 = vmatprep.subr.mxu0 0.0
        %2055 = vmatpush1.msra.mxu0 0.0
        %2056 = vmatprep.subr.mxu0 0.0
        %2057 = vmatpush1.msra.mxu0 0.0
        %2058 = vmatprep.subr.mxu0 0.0
        %2059 = vmatpush1.msra.mxu0 0.0
        %2060 = vmatprep.subr.mxu0 0.0
        %2061 = vmatpush1.msra.mxu0 0.0
        %2062 = vmatprep.subr.mxu0 0.0
        %2063 = vmatpush1.msra.mxu0 0.0
        %2064 = vmatprep.subr.mxu0 0.0
        %2065 = vmatpush1.msra.mxu0 0.0
        %2066 = vmatprep.subr.mxu0 0.0
        %2067 = vmatpush1.msra.mxu0 0.0
        %2068 = vmatprep.subr.mxu0 0.0
        %2069 = vmatpush1.msra.mxu0 %v2034
        %2070 = vmatprep.subr.mxu0 0.0
        %2071 = vmatpush2.msra.mxu0 0.0
        %2072 = vmatprep.subr.mxu0 0.0
        %2073 = vmatpush2.msra.mxu0 0.0
        %2074 = vmatprep.subr.mxu0 0.0
        %2075 = vmatpush2.msra.mxu0 0.0
        %2076 = vmatprep.subr.mxu0 0.0
        %2077 = vmatpush2.msra.mxu0 0.0
        %2078 = vmatprep.subr.mxu0 0.0
        %2079 = vmatpush2.msra.mxu0 0.0
        %2080 = vmatprep.subr.mxu0 0.0
        %2081 = vmatpush2.msra.mxu0 0.0
        %2082 = vmatprep.subr.mxu0 0.0
        %2083 = vmatpush2.msra.mxu0 0.0
        %2084 = vmatprep.subr.mxu0 0.0
        %2085 = vmatpush2.msra.mxu0 0.0
        %2086 = vmatprep.subr.mxu0 0.0
        %2087 = vmatpush2.msra.mxu0 0.0
        %2088 = vmatprep.subr.mxu0 0.0
        %2089 = vmatpush2.msra.mxu0 0.0
        %2090 = vmatprep.subr.mxu0 0.0
        %2091 = vmatpush2.msra.mxu0 0.0
        %2092 = vmatprep.subr.mxu0 0.0
        %2093 = vmatpush2.msra.mxu0 0.0
        %2094 = vmatprep.subr.mxu0 0.0
        %2095 = vmatpush2.msra.mxu0 0.0
        %2096 = vmatprep.subr.mxu0 0.0
        %2097 = vmatpush2.msra.mxu0 0.0
        %2098 = vmatprep.subr.mxu0 0.0
        %2099 = vmatpush2.msra.mxu0 0.0
        %2100 = vmatprep.subr.mxu0 0.0
        %2101 = vmatpush2.msra.mxu0 0.0
        %2102 = vmatprep.mubr.f32.mxu0 0.0
        %2103 = vmatmul.mubr.f32.gmra.mxu0 %v2036
        %v2104 = vpop.f32.mrf.mxu0
        %v2105 = vadd.f32 0.0, %v2104
        %v2106 = vpop.f32.mrf.mxu0
        %2107 = vdwg.mxu0
        %v2108 = vsel %vm2035, %v1006, 0
        %2110 = vmatprep.subr.mxu0 0.0
        %2111 = vmatpush1.msra.mxu0 0.0
        %2112 = vmatprep.subr.mxu0 0.0
        %2113 = vmatpush1.msra.mxu0 0.0
        %2114 = vmatprep.subr.mxu0 0.0
        %2115 = vmatpush1.msra.mxu0 0.0
        %2116 = vmatprep.subr.mxu0 0.0
        %2117 = vmatpush1.msra.mxu0 0.0
        %2118 = vmatprep.subr.mxu0 0.0
        %2119 = vmatpush1.msra.mxu0 0.0
        %2120 = vmatprep.subr.mxu0 0.0
        %2121 = vmatpush1.msra.mxu0 0.0
        %2122 = vmatprep.subr.mxu0 0.0
        %2123 = vmatpush1.msra.mxu0 0.0
        %2124 = vmatprep.subr.mxu0 0.0
        %2125 = vmatpush1.msra.mxu0 0.0
        %2126 = vmatprep.subr.mxu0 0.0
        %2127 = vmatpush1.msra.mxu0 0.0
        %2128 = vmatprep.subr.mxu0 0.0
        %2129 = vmatpush1.msra.mxu0 0.0
        %2130 = vmatprep.subr.mxu0 0.0
        %2131 = vmatpush1.msra.mxu0 0.0
        %2132 = vmatprep.subr.mxu0 0.0
        %2133 = vmatpush1.msra.mxu0 0.0
        %2134 = vmatprep.subr.mxu0 0.0
        %2135 = vmatpush1.msra.mxu0 0.0
        %2136 = vmatprep.subr.mxu0 0.0
        %2137 = vmatpush1.msra.mxu0 0.0
        %2138 = vmatprep.subr.mxu0 0.0
        %2139 = vmatpush1.msra.mxu0 0.0
        %2140 = vmatprep.subr.mxu0 0.0
        %2141 = vmatpush1.msra.mxu0 %v2034
        %2142 = vmatprep.subr.mxu0 0.0
        %2143 = vmatpush2.msra.mxu0 0.0
        %2144 = vmatprep.subr.mxu0 0.0
        %2145 = vmatpush2.msra.mxu0 0.0
        %2146 = vmatprep.subr.mxu0 0.0
        %2147 = vmatpush2.msra.mxu0 0.0
        %2148 = vmatprep.subr.mxu0 0.0
        %2149 = vmatpush2.msra.mxu0 0.0
        %2150 = vmatprep.subr.mxu0 0.0
        %2151 = vmatpush2.msra.mxu0 0.0
        %2152 = vmatprep.subr.mxu0 0.0
        %2153 = vmatpush2.msra.mxu0 0.0
        %2154 = vmatprep.subr.mxu0 0.0
        %2155 = vmatpush2.msra.mxu0 0.0
        %2156 = vmatprep.subr.mxu0 0.0
        %2157 = vmatpush2.msra.mxu0 0.0
        %2158 = vmatprep.subr.mxu0 0.0
        %2159 = vmatpush2.msra.mxu0 0.0
        %2160 = vmatprep.subr.mxu0 0.0
        %2161 = vmatpush2.msra.mxu0 0.0
        %2162 = vmatprep.subr.mxu0 0.0
        %2163 = vmatpush2.msra.mxu0 0.0
        %2164 = vmatprep.subr.mxu0 0.0
        %2165 = vmatpush2.msra.mxu0 0.0
        %2166 = vmatprep.subr.mxu0 0.0
        %2167 = vmatpush2.msra.mxu0 0.0
        %2168 = vmatprep.subr.mxu0 0.0
        %2169 = vmatpush2.msra.mxu0 0.0
        %2170 = vmatprep.subr.mxu0 0.0
        %2171 = vmatpush2.msra.mxu0 0.0
        %2172 = vmatprep.subr.mxu0 0.0
        %2173 = vmatpush2.msra.mxu0 0.0
        %2174 = vmatprep.mubr.f32.mxu0 0.0
        %2175 = vmatmul.mubr.f32.gmra.mxu0 %v2108
        %v2176 = vpop.f32.mrf.mxu0
        %v2177 = vadd.f32 0.0, %v2176
        %v2178 = vpop.f32.mrf.mxu0
        %2179 = vdwg.mxu0
        %v2180 = vmax.f32 %v2105, %v2177
        %v2181 = vsel %vm2035, %v1110, 0
        %2183 = vmatprep.subr.mxu0 0.0
        %2184 = vmatpush1.msra.mxu0 0.0
        %2185 = vmatprep.subr.mxu0 0.0
        %2186 = vmatpush1.msra.mxu0 0.0
        %2187 = vmatprep.subr.mxu0 0.0
        %2188 = vmatpush1.msra.mxu0 0.0
        %2189 = vmatprep.subr.mxu0 0.0
        %2190 = vmatpush1.msra.mxu0 0.0
        %2191 = vmatprep.subr.mxu0 0.0
        %2192 = vmatpush1.msra.mxu0 0.0
        %2193 = vmatprep.subr.mxu0 0.0
        %2194 = vmatpush1.msra.mxu0 0.0
        %2195 = vmatprep.subr.mxu0 0.0
        %2196 = vmatpush1.msra.mxu0 0.0
        %2197 = vmatprep.subr.mxu0 0.0
        %2198 = vmatpush1.msra.mxu0 0.0
        %2199 = vmatprep.subr.mxu0 0.0
        %2200 = vmatpush1.msra.mxu0 0.0
        %2201 = vmatprep.subr.mxu0 0.0
        %2202 = vmatpush1.msra.mxu0 0.0
        %2203 = vmatprep.subr.mxu0 0.0
        %2204 = vmatpush1.msra.mxu0 0.0
        %2205 = vmatprep.subr.mxu0 0.0
        %2206 = vmatpush1.msra.mxu0 0.0
        %2207 = vmatprep.subr.mxu0 0.0
        %2208 = vmatpush1.msra.mxu0 0.0
        %2209 = vmatprep.subr.mxu0 0.0
        %2210 = vmatpush1.msra.mxu0 0.0
        %2211 = vmatprep.subr.mxu0 0.0
        %2212 = vmatpush1.msra.mxu0 0.0
        %2213 = vmatprep.subr.mxu0 0.0
        %2214 = vmatpush1.msra.mxu0 %v2034
        %2215 = vmatprep.subr.mxu0 0.0
        %2216 = vmatpush2.msra.mxu0 0.0
        %2217 = vmatprep.subr.mxu0 0.0
        %2218 = vmatpush2.msra.mxu0 0.0
        %2219 = vmatprep.subr.mxu0 0.0
        %2220 = vmatpush2.msra.mxu0 0.0
        %2221 = vmatprep.subr.mxu0 0.0
        %2222 = vmatpush2.msra.mxu0 0.0
        %2223 = vmatprep.subr.mxu0 0.0
        %2224 = vmatpush2.msra.mxu0 0.0
        %2225 = vmatprep.subr.mxu0 0.0
        %2226 = vmatpush2.msra.mxu0 0.0
        %2227 = vmatprep.subr.mxu0 0.0
        %2228 = vmatpush2.msra.mxu0 0.0
        %2229 = vmatprep.subr.mxu0 0.0
        %2230 = vmatpush2.msra.mxu0 0.0
        %2231 = vmatprep.subr.mxu0 0.0
        %2232 = vmatpush2.msra.mxu0 0.0
        %2233 = vmatprep.subr.mxu0 0.0
        %2234 = vmatpush2.msra.mxu0 0.0
        %2235 = vmatprep.subr.mxu0 0.0
        %2236 = vmatpush2.msra.mxu0 0.0
        %2237 = vmatprep.subr.mxu0 0.0
        %2238 = vmatpush2.msra.mxu0 0.0
        %2239 = vmatprep.subr.mxu0 0.0
        %2240 = vmatpush2.msra.mxu0 0.0
        %2241 = vmatprep.subr.mxu0 0.0
        %2242 = vmatpush2.msra.mxu0 0.0
        %2243 = vmatprep.subr.mxu0 0.0
        %2244 = vmatpush2.msra.mxu0 0.0
        %2245 = vmatprep.subr.mxu0 0.0
        %2246 = vmatpush2.msra.mxu0 0.0
        %2247 = vmatprep.mubr.f32.mxu0 0.0
        %2248 = vmatmul.mubr.f32.gmra.mxu0 %v2181
        %v2249 = vpop.f32.mrf.mxu0
        %v2250 = vadd.f32 0.0, %v2249
        %v2251 = vpop.f32.mrf.mxu0
        %2252 = vdwg.mxu0
        %v2253 = vmax.f32 %v2180, %v2250
        %s2254 = scalar_lea.vmem [#allocation2], 512
        %v2255 = vld [vmem:[%s2254] sm:$0xf]
        %v2256 = vld [vmem:[%s2254 + $0x4] sm:$0xf]
        %v2257 = vld [vmem:[%s2254 + $0x8] sm:$0xf]
        %v2258 = vld [vmem:[%s2254 + $0xc] sm:$0xf]
        %v2259 = vld [vmem:[%s2254 + $0x10] sm:$0xf]
        %v2260 = vld [vmem:[%s2254 + $0x14] sm:$0xf]
        %v2261 = vld [vmem:[%s2254 + $0x18] sm:$0xf]
        %v2262 = vld [vmem:[%s2254 + $0x1c] sm:$0xf]
        %v2263 = vld [vmem:[%s2254 + $0x20] sm:$0xf]
        %v2264 = vld [vmem:[%s2254 + $0x24] sm:$0xf]
        %v2265 = vld [vmem:[%s2254 + $0x28] sm:$0xf]
        %v2266 = vld [vmem:[%s2254 + $0x2c] sm:$0xf]
        %v2267 = vld [vmem:[%s2254 + $0x30] sm:$0xf]
        %v2268 = vld [vmem:[%s2254 + $0x34] sm:$0xf]
        %v2269 = vld [vmem:[%s2254 + $0x38] sm:$0xf]
        %v2270 = vld [vmem:[%s2254 + $0x3c] sm:$0xf]
        %v2271 = vpack.c.bf16 %v2253, %v2253
        %v2272 = vld [vmem:[%s2 + $0x7] sm:$0x1]
        %v2273 = vlaneseq
        %v2274 = vshrl.u32 %v2273, 7
        %v2275 = vsub.s32 0, %v2274
        %v2276 = vrot.slane %v2272, %v2275
        %v2293 = vunpack.c.l.b16 %v2255
        %v2294 = vunpack.c.l.b16 %v2256
        %v2295 = vunpack.c.l.b16 %v2257
        %v2296 = vunpack.c.l.b16 %v2258
        %v2297 = vunpack.c.l.b16 %v2259
        %v2298 = vunpack.c.l.b16 %v2260
        %v2299 = vunpack.c.l.b16 %v2261
        %v2300 = vunpack.c.l.b16 %v2262
        %v2301 = vunpack.c.l.b16 %v2263
        %v2302 = vunpack.c.l.b16 %v2264
        %v2303 = vunpack.c.l.b16 %v2265
        %v2304 = vunpack.c.l.b16 %v2266
        %v2305 = vunpack.c.l.b16 %v2267
        %v2306 = vunpack.c.l.b16 %v2268
        %v2307 = vunpack.c.l.b16 %v2269
        %v2308 = vunpack.c.l.b16 %v2270
        %v2309 = vpack.c.b16 %v2294, %v2293
        %v2310 = vpack.c.b16 %v2296, %v2295
        %v2311 = vpack.c.b16 %v2298, %v2297
        %v2312 = vpack.c.b16 %v2300, %v2299
        %v2313 = vpack.c.b16 %v2302, %v2301
        %v2314 = vpack.c.b16 %v2304, %v2303
        %v2315 = vpack.c.b16 %v2306, %v2305
        %v2316 = vpack.c.b16 %v2308, %v2307
        %2325 = vmatprep.subr.bf16.mxu0 0
        %2326 = vmatpush1.bf16.msra.mxu0 %v2316
        %2327 = vmatprep.subr.bf16.mxu0 0
        %2328 = vmatpush1.bf16.msra.mxu0 %v2315
        %2329 = vmatprep.subr.bf16.mxu0 0
        %2330 = vmatpush1.bf16.msra.mxu0 %v2314
        %2331 = vmatprep.subr.bf16.mxu0 0
        %2332 = vmatpush1.bf16.msra.mxu0 %v2313
        %2333 = vmatprep.subr.bf16.mxu0 0
        %2334 = vmatpush1.bf16.msra.mxu0 %v2312
        %2335 = vmatprep.subr.bf16.mxu0 0
        %2336 = vmatpush1.bf16.msra.mxu0 %v2311
        %2337 = vmatprep.subr.bf16.mxu0 0
        %2338 = vmatpush1.bf16.msra.mxu0 %v2310
        %2339 = vmatprep.subr.bf16.mxu0 0
        %2340 = vmatpush1.bf16.msra.mxu0 %v2309
        %2341 = vmatprep.subr.bf16.mxu0 0
        %2342 = vmatpush2.bf16.msra.mxu0 0
        %2343 = vmatprep.subr.bf16.mxu0 0
        %2344 = vmatpush2.bf16.msra.mxu0 0
        %2345 = vmatprep.subr.bf16.mxu0 0
        %2346 = vmatpush2.bf16.msra.mxu0 0
        %2347 = vmatprep.subr.bf16.mxu0 0
        %2348 = vmatpush2.bf16.msra.mxu0 0
        %2349 = vmatprep.subr.bf16.mxu0 0
        %2350 = vmatpush2.bf16.msra.mxu0 0
        %2351 = vmatprep.subr.bf16.mxu0 0
        %2352 = vmatpush2.bf16.msra.mxu0 0
        %2353 = vmatprep.subr.bf16.mxu0 0
        %2354 = vmatpush2.bf16.msra.mxu0 0
        %2355 = vmatprep.subr.bf16.mxu0 0
        %2356 = vmatpush2.bf16.msra.mxu0 0
        %2357 = vmatprep.mubr.bf16.mxu0 0
        %2358 = vmatmul.mubr.bf16.gmra.mxu0 %v2271
        %v2359 = vpop.f32.mrf.mxu0
        %v2360 = vadd.f32 %v2276, %v2359
        %v2361 = vpop.f32.mrf.mxu0
        %v2362 = vpop.f32.mrf.mxu0
        %v2363 = vpop.f32.mrf.mxu0
        %2364 = vdwg.mxu0
        %vm2365 = vcmask 1041408
        %v2366 = vsel %vm2365, %v2360, 0.0
        %v2367 = vrot.slane %v2366, 4
        %v2368 = vadd.f32 %v2366, %v2367
        %v2369 = vrot.slane %v2368, 2
        %v2370 = vadd.f32 %v2368, %v2369
        %v2371 = vrot.slane %v2370, 1
        %v2372 = vadd.f32 %v2370, %v2371
        %v2373 = vrcp.pop 2.0
        %v2374 = vmul.f32 %v2372, %v2373
        %2375 = vst [vmem:[%s249] sm:$0x1] %v2374
        %s2376 = scalar_lea.vmem [#allocation2], 576
        %v2377 = vld [vmem:[%s2376] sm:$0xf]
        %v2378 = vld [vmem:[%s2376 + $0x4] sm:$0xf]
        %v2379 = vld [vmem:[%s2376 + $0x8] sm:$0xf]
        %v2380 = vld [vmem:[%s2376 + $0xc] sm:$0xf]
        %v2381 = vld [vmem:[%s2376 + $0x10] sm:$0xf]
        %v2382 = vld [vmem:[%s2376 + $0x14] sm:$0xf]
        %v2383 = vld [vmem:[%s2376 + $0x18] sm:$0xf]
        %v2384 = vld [vmem:[%s2376 + $0x1c] sm:$0xf]
        %v2385 = vld [vmem:[%s2376 + $0x20] sm:$0xf]
        %v2386 = vld [vmem:[%s2376 + $0x24] sm:$0xf]
        %v2387 = vld [vmem:[%s2376 + $0x28] sm:$0xf]
        %v2388 = vld [vmem:[%s2376 + $0x2c] sm:$0xf]
        %v2389 = vld [vmem:[%s2376 + $0x30] sm:$0xf]
        %v2390 = vld [vmem:[%s2376 + $0x34] sm:$0xf]
        %v2391 = vld [vmem:[%s2376 + $0x38] sm:$0xf]
        %v2392 = vld [vmem:[%s2376 + $0x3c] sm:$0xf]
        %v2393 = vpack.c.bf16 %v2374, %v2374
        %v2394 = vld [vmem:[%s2 + $0x8] sm:$0x1]
        %v2411 = vunpack.c.l.b16 %v2377
        %v2412 = vunpack.c.l.b16 %v2378
        %v2413 = vunpack.c.l.b16 %v2379
        %v2414 = vunpack.c.l.b16 %v2380
        %v2415 = vunpack.c.l.b16 %v2381
        %v2416 = vunpack.c.l.b16 %v2382
        %v2417 = vunpack.c.l.b16 %v2383
        %v2418 = vunpack.c.l.b16 %v2384
        %v2419 = vunpack.c.l.b16 %v2385
        %v2420 = vunpack.c.l.b16 %v2386
        %v2421 = vunpack.c.l.b16 %v2387
        %v2422 = vunpack.c.l.b16 %v2388
        %v2423 = vunpack.c.l.b16 %v2389
        %v2424 = vunpack.c.l.b16 %v2390
        %v2425 = vunpack.c.l.b16 %v2391
        %v2426 = vunpack.c.l.b16 %v2392
        %v2427 = vpack.c.b16 %v2412, %v2411
        %v2428 = vpack.c.b16 %v2414, %v2413
        %v2429 = vpack.c.b16 %v2416, %v2415
        %v2430 = vpack.c.b16 %v2418, %v2417
        %v2431 = vpack.c.b16 %v2420, %v2419
        %v2432 = vpack.c.b16 %v2422, %v2421
        %v2433 = vpack.c.b16 %v2424, %v2423
        %v2434 = vpack.c.b16 %v2426, %v2425
        %2443 = vmatprep.subr.bf16.mxu0 0
        %2444 = vmatpush1.bf16.msra.mxu0 %v2434
        %2445 = vmatprep.subr.bf16.mxu0 0
        %2446 = vmatpush1.bf16.msra.mxu0 %v2433
        %2447 = vmatprep.subr.bf16.mxu0 0
        %2448 = vmatpush1.bf16.msra.mxu0 %v2432
        %2449 = vmatprep.subr.bf16.mxu0 0
        %2450 = vmatpush1.bf16.msra.mxu0 %v2431
        %2451 = vmatprep.subr.bf16.mxu0 0
        %2452 = vmatpush1.bf16.msra.mxu0 %v2430
        %2453 = vmatprep.subr.bf16.mxu0 0
        %2454 = vmatpush1.bf16.msra.mxu0 %v2429
        %2455 = vmatprep.subr.bf16.mxu0 0
        %2456 = vmatpush1.bf16.msra.mxu0 %v2428
        %2457 = vmatprep.subr.bf16.mxu0 0
        %2458 = vmatpush1.bf16.msra.mxu0 %v2427
        %2459 = vmatprep.subr.bf16.mxu0 0
        %2460 = vmatpush2.bf16.msra.mxu0 0
        %2461 = vmatprep.subr.bf16.mxu0 0
        %2462 = vmatpush2.bf16.msra.mxu0 0
        %2463 = vmatprep.subr.bf16.mxu0 0
        %2464 = vmatpush2.bf16.msra.mxu0 0
        %2465 = vmatprep.subr.bf16.mxu0 0
        %2466 = vmatpush2.bf16.msra.mxu0 0
        %2467 = vmatprep.subr.bf16.mxu0 0
        %2468 = vmatpush2.bf16.msra.mxu0 0
        %2469 = vmatprep.subr.bf16.mxu0 0
        %2470 = vmatpush2.bf16.msra.mxu0 0
        %2471 = vmatprep.subr.bf16.mxu0 0
        %2472 = vmatpush2.bf16.msra.mxu0 0
        %2473 = vmatprep.subr.bf16.mxu0 0
        %2474 = vmatpush2.bf16.msra.mxu0 0
        %2475 = vmatprep.mubr.bf16.mxu0 0
        %2476 = vmatmul.mubr.bf16.gmra.mxu0 %v2393
        %v2477 = vpop.f32.mrf.mxu0
        %v2478 = vadd.f32 %v2394, %v2477
        %v2479 = vpop.f32.mrf.mxu0
        %v2480 = vpop.f32.mrf.mxu0
        %v2481 = vpop.f32.mrf.mxu0
        %2482 = vdwg.mxu0
        %2483 = vst [vmem:[%s255] sm:$0x1] %v2478
        %s2484 = sand.u32 %s122, 1
        %s2485 = scalar_lea.sflag [#allocation4], %s2484
        %s2486 = sand.u32 %s122, 1
        %s2487 = scalar_lea.vmem [#allocation7], %s2486
        %s2488 = sand.u32 %s148, 1
        %s2489 = scalar_lea.sflag [#allocation9], %s2488
        %s2490 = sand.u32 %s148, 1
        %s2491 = scalar_lea.vmem [#allocation8], %s2490
        // Predicated region
        $region45: #{speaker_encoder_short.1} parent=35 // pred_check
          %p2492 = pneg %p132
        $region46: #{speaker_encoder_short.1} parent=35 // pred_check_branch
          %2494 = sbr.rel (%p2492) target = $region48
        $region47: #{speaker_encoder_short.1} parent=35 // pred_region
          %s2496 = ssub.s32 16, 16
          %2497 = vsyncadd %s2485, %s2496
          %s2498 = smul.addr %s25, 16
          %s2499 = scalar_lea.hbm %s4, %s2498
          %s2501 = sshll.u32 %s2487, 4
          %s2502 = int_to_ptr.vmem [resolvable:$true] %s2501
          %2504 = dma.vmem_to_hbm [thread:$0]  %s2502, 16, %s2499, %s2485
        $region48: #{speaker_encoder_short.1} parent=35 // pred_fallthru
          _
        // Predicated region
        $region49: #{speaker_encoder_short.1} parent=35 // pred_check
          %p2505 = pneg %p158
        $region50: #{speaker_encoder_short.1} parent=35 // pred_check_branch
          %2507 = sbr.rel (%p2505) target = $region52
        $region51: #{speaker_encoder_short.1} parent=35 // pred_region
          %s2509 = ssub.s32 16, 16
          %2510 = vsyncadd %s2489, %s2509
          %s2511 = smul.addr %s25, 16
          %s2512 = scalar_lea.hbm %s5, %s2511
          %s2514 = sshll.u32 %s2491, 4
          %s2515 = int_to_ptr.vmem [resolvable:$true] %s2514
          %2517 = dma.vmem_to_hbm [thread:$0]  %s2515, 16, %s2512, %s2489
        $region52: #{speaker_encoder_short.1} parent=35 // pred_fallthru
          _
      $region36: #{speaker_encoder_short.1} parent=5 // pred_fallthru
        _
      %p2518 = scmp.le.s32.totalorder 2, %s20
      // Predicated region
      $region53: #{speaker_encoder_short.1} parent=5 // pred_check
        %p2519 = pneg %p2518
      $region54: #{speaker_encoder_short.1} parent=5 // pred_check_branch
        %2521 = sbr.rel (%p2519) target = $region56
      $region55: #{speaker_encoder_short.1} parent=5 // pred_region
        %s2522 = ssub.s32 %s20, 2
        // Predicated region
        $region57: #{speaker_encoder_short.1} parent=55 // pred_check
          %p2523 = pneg %p138
        $region58: #{speaker_encoder_short.1} parent=55 // pred_check_branch
          %2525 = sbr.rel (%p2523) target = $region60
        $region59: #{speaker_encoder_short.1} parent=55 // pred_region
          %s2526 = sand.u32 %s123, 1
          %s2527 = scalar_lea.sflag [#allocation4], %s2526
          %s2528 = sand.u32 %s123, 1
          %s2529 = scalar_lea.vmem [#allocation7], %s2528
          %2530 = dma.done %s2527, 16
        $region60: #{speaker_encoder_short.1} parent=55 // pred_fallthru
          _
        // Predicated region
        $region61: #{speaker_encoder_short.1} parent=55 // pred_check
          %p2531 = pneg %p164
        $region62: #{speaker_encoder_short.1} parent=55 // pred_check_branch
          %2533 = sbr.rel (%p2531) target = $region64
        $region63: #{speaker_encoder_short.1} parent=55 // pred_region
          %s2534 = sand.u32 %s149, 1
          %s2535 = scalar_lea.sflag [#allocation9], %s2534
          %s2536 = sand.u32 %s149, 1
          %s2537 = scalar_lea.vmem [#allocation8], %s2536
          %2538 = dma.done %s2535, 16
        $region64: #{speaker_encoder_short.1} parent=55 // pred_fallthru
          _
      $region56: #{speaker_encoder_short.1} parent=5 // pred_fallthru
        _
    $region6: #{speaker_encoder_short.1} parent=1 // loop_footer
      %s24 = sadd.s32 1, %s20
    $region7: #{speaker_encoder_short.1} parent=1 // loop_footer_branch
      %19 = sbr.rel target = $region3
    $region8: #{speaker_encoder_short.1} parent=1 // loop_exit
      _
    %2539 = vsyncpa [#allocation3], 1
    %s2540 = scalar_lea.sflag [#allocation3], 1
    %2541 = vsyncpa %s2540, 1
    %2542 = vsyncpa [#allocation4], 1
    %s2543 = scalar_lea.sflag [#allocation4], 1
    %2544 = vsyncpa %s2543, 1
    %2545 = vsyncpa [#allocation9], 1
    %s2546 = scalar_lea.sflag [#allocation9], 1
    %2547 = vsyncpa %s2546, 1
    %2548 = vsyncpa [#allocation5], 1
    %s2549 = scalar_lea.sflag [#allocation5], 1
    %2550 = vsyncpa %s2549, 1

</llo_original>
